<compile_context>
chip_gen: v5e
topology: v5e:2x2
jax: 0.10.0
libtpu: 0.0.40
codegen_flags: <defaults>
</compile_context>

<pallas_src>
import functools

import jax
import jax.numpy as jnp
from jax import lax
from jax.experimental import pallas as pl
from jax.experimental.pallas import tpu as pltpu

EPS = 1e-5
_VMEM_LIMIT = 64 * 1024 * 1024


# ----------------------------------------------------------------------------
# Kernel U: MaxUnpool2d(kernel=2, stride=2), emitting a padded bf16 result in
# a layout whose full-res (B, H+4, W+4, Cin) view is a free metadata reshape.
#   x_ref   : (1, H0+2, W0+2, Cin)  f32 pooled values, zero-padded ring
#   idx_ref : (1, H0+2, W0+2, Cin)  i32 flat output-plane indices (pad = -1)
#   o_ref   : (1, H0+2, 2, W0+2, 2*Cin)  bf16; axes = (i, dy, j, dx*Cin + c)
# ----------------------------------------------------------------------------
def _unpool_kernel(x_ref, idx_ref, o_ref, *, Wout):
    x = x_ref[0]          # (H0p, W0p, Cin) f32
    idx = idx_ref[0]      # (H0p, W0p, Cin) i32
    H0p, W0p, Cin = x.shape
    # pooled coordinates of the *unpadded* grid; the padded ring has x == 0 so
    # any spurious match there still deposits 0 (correct zero padding).
    i0 = lax.broadcasted_iota(jnp.int32, (H0p, W0p, Cin), 0) - 1
    j0 = lax.broadcasted_iota(jnp.int32, (H0p, W0p, Cin), 1) - 1
    # idx == (2*i0+dy)*Wout + (2*j0+dx)  =>  rem == dy*Wout + dx
    rem = idx - (2 * i0 * Wout + 2 * j0)
    zero = jnp.zeros_like(x)

    rows = []
    for dy in range(2):
        cols = [jnp.where(rem == dy * Wout + dx, x, zero) for dx in range(2)]
        rows.append(jnp.concatenate(cols, axis=-1)[:, None])   # (H0p,1,W0p,2Cin)
    o_ref[0] = jnp.concatenate(rows, axis=1).astype(o_ref.dtype)


def max_unpool2x2_padded(x_nhwc, idx_nhwc):
    """x: (B,H0,W0,C) f32, idx: (B,H0,W0,C) i32 (flat index into the 2H0 x 2W0
    plane).  Returns the unpooled tensor zero-padded by 2 pixels per side:
    (B, 2H0+4, 2W0+4, C) in bf16."""
    B, H0, W0, C = x_nhwc.shape
    H, W = 2 * H0, 2 * W0
    xp = jnp.pad(x_nhwc.astype(jnp.float32), ((0, 0), (1, 1), (1, 1), (0, 0)))
    idxp = jnp.pad(idx_nhwc.astype(jnp.int32), ((0, 0), (1, 1), (1, 1), (0, 0)),
                   constant_values=-1)
    H0p, W0p = H0 + 2, W0 + 2

    out5 = pl.pallas_call(
        functools.partial(_unpool_kernel, Wout=W),
        out_shape=jax.ShapeDtypeStruct((B, H0p, 2, W0p, 2 * C), jnp.bfloat16),
        grid=(B,),
        in_specs=[
            pl.BlockSpec((1, H0p, W0p, C), lambda b: (b, 0, 0, 0)),
            pl.BlockSpec((1, H0p, W0p, C), lambda b: (b, 0, 0, 0)),
        ],
        out_specs=pl.BlockSpec((1, H0p, 2, W0p, 2 * C),
                               lambda b: (b, 0, 0, 0, 0)),
        compiler_params=pltpu.CompilerParams(
            dimension_semantics=("parallel",),
            vmem_limit_bytes=_VMEM_LIMIT),
    )(xp, idxp)

    # (i, dy, j, dx, c) flattens row-major to ((2i+dy), (2j+dx), c):
    # a free, metadata-only reshape (no transpose pass over the activation).
    return out5.reshape(B, H + 4, W + 4, C)


# ----------------------------------------------------------------------------
# Kernel C: fused  conv3x3(+folded BN)+ReLU  ->  conv3x3(+folded BN)+ReLU.
#   x_ref  : (1, H+4, W+4, Cin)  bf16 padded unpooled input
#   w1_ref : (9*Cin, Cout)       bf16, BN1 scale folded in
#   t1_ref : (1, Cout)           f32 folded BN1 shift
#   w2_ref : (9*Cout, Cout)      bf16, BN2 scale folded in
#   t2_ref : (1, Cout)           f32 folded BN2 shift
#   o_ref  : (1, H, W, Cout)     bf16
#   c1_ref : (H+2, W+2, Cout)    bf16 VMEM scratch (conv1 output, pre-padded)
# ----------------------------------------------------------------------------
def _fused_conv_kernel(x_ref, w1_ref, t1_ref, w2_ref, t2_ref, o_ref, c1_ref,
                       *, H, W, Cin, Cout, TH1, TH2):
    Wc1 = W + 2
    w1 = w1_ref[...]
    w2 = w2_ref[...]
    t1 = t1_ref[...]
    t2 = t2_ref[...]

    # rows 0 and H+1 of the conv1 scratch are conv2's zero padding
    zrow = jnp.zeros((1, Wc1, Cout), c1_ref.dtype)
    c1_ref[0:1, :, :] = zrow
    c1_ref[H + 1:H + 2, :, :] = zrow

    # hoisted mask that zeroes conv1's two padding columns (cols 0 and W+1)
    col1 = lax.broadcasted_iota(jnp.int32, (TH1 * Wc1, Cout), 0) % Wc1
    mask1 = ((col1 > 0) & (col1 <= W)).astype(jnp.float32)

    # ---- layer1: up_pad (H+4,W+4,Cin) -> c1 scratch (H+2,W+2,Cout), bf16
    def conv1_chunk(m, carry):
        r0 = m * TH1                                        # first output row
        block = x_ref[0, pl.ds(r0 + 1, TH1 + 2), :, :]      # (TH1+2, W+4, Cin)
        taps = []
        for kh in range(3):
            rows = block[kh:kh + TH1]
            for kw in range(3):
                taps.append(rows[:, kw:kw + Wc1, :])        # (TH1, W+2, Cin)
        patch = jnp.concatenate(taps, axis=-1).reshape(TH1 * Wc1, 9 * Cin)
        acc = jnp.dot(patch, w1, preferred_element_type=jnp.float32)
        y = jnp.maximum(acc + t1, 0.0) * mask1
        c1_ref[pl.ds(r0 + 1, TH1), :, :] = (
            y.astype(c1_ref.dtype).reshape(TH1, Wc1, Cout))
        return carry

    lax.fori_loop(0, H // TH1, conv1_chunk, 0, unroll=True)

    # ---- layer2: c1 scratch -> o_ref (H,W,Cout), bf16
    def conv2_chunk(m, carry):
        r0 = m * TH2
        block = c1_ref[pl.ds(r0, TH2 + 2), :, :]            # (TH2+2, W+2, Cout)
        taps = []
        for kh in range(3):
            rows = block[kh:kh + TH2]
            for kw in range(3):
                taps.append(rows[:, kw:kw + W, :])          # (TH2, W, Cout)
        patch = jnp.concatenate(taps, axis=-1).reshape(TH2 * W, 9 * Cout)
        acc = jnp.dot(patch, w2, preferred_element_type=jnp.float32)
        y = jnp.maximum(acc + t2, 0.0)
        o_ref[0, pl.ds(r0, TH2), :, :] = (
            y.astype(o_ref.dtype).reshape(TH2, W, Cout))
        return carry

    lax.fori_loop(0, H // TH2, conv2_chunk, 0, unroll=True)


def _pick_chunk_rows(H, row_len, k_depth, cout, budget_bytes=3 << 20):
    """Largest divisor of H (preferring multiples of 8) whose per-chunk
    f32 accumulator + f32 mask + bf16 im2col patch stays under the budget."""
    per_row = row_len * (8 * cout + 2 * k_depth)
    cap = max(1, budget_bytes // max(per_row, 1))
    best, best8 = 1, 0
    for d in range(1, H + 1):
        if H % d == 0 and d <= cap:
            best = d
            if d % 8 == 0:
                best8 = d
    return best8 if best8 else best


def fused_conv_bn_relu_x2(up_pad, w1f, t1, w2f, t2):
    """up_pad: (B, H+4, W+4, Cin) bf16, 2-pixel zero pad on each side.
    Returns (B, H, W, Cout) bf16 = ReLU(BN2(conv2(ReLU(BN1(conv1(up))))))."""
    B, Hp4, Wp4, Cin = up_pad.shape
    H, W = Hp4 - 4, Wp4 - 4
    Cout = w1f.shape[-1]

    TH1 = _pick_chunk_rows(H, W + 2, 9 * Cin, Cout)
    TH2 = _pick_chunk_rows(H, W, 9 * Cout, Cout)

    kernel = functools.partial(_fused_conv_kernel, H=H, W=W, Cin=Cin, Cout=Cout,
                               TH1=TH1, TH2=TH2)
    return pl.pallas_call(
        kernel,
        out_shape=jax.ShapeDtypeStruct((B, H, W, Cout), jnp.bfloat16),
        grid=(B,),
        in_specs=[
            pl.BlockSpec((1, Hp4, Wp4, Cin), lambda b: (b, 0, 0, 0)),
            pl.BlockSpec((9 * Cin, Cout), lambda b: (0, 0)),
            pl.BlockSpec((1, Cout), lambda b: (0, 0)),
            pl.BlockSpec((9 * Cout, Cout), lambda b: (0, 0)),
            pl.BlockSpec((1, Cout), lambda b: (0, 0)),
        ],
        out_specs=pl.BlockSpec((1, H, W, Cout), lambda b: (b, 0, 0, 0)),
        scratch_shapes=[pltpu.VMEM((H + 2, W + 2, Cout), jnp.bfloat16)],
        compiler_params=pltpu.CompilerParams(
            dimension_semantics=("parallel",),
            vmem_limit_bytes=_VMEM_LIMIT),
    )(up_pad, w1f, t1, w2f, t2)


# ----------------------------------------------------------------------------
# decoder1 forward (NCHW in / NCHW out, like the PyTorch module)
# ----------------------------------------------------------------------------
def _fold_bn(bias, gamma, beta, mean, var):
    scale = gamma / jnp.sqrt(var + EPS)
    shift = (bias - mean) * scale + beta
    return scale, shift


def decoder1_forward(x_nchw, idx_nchw, output_size, p):
    B, Cin, H0, W0 = x_nchw.shape
    Hout, Wout = int(output_size[-2]), int(output_size[-1])
    assert (Hout, Wout) == (2 * H0, 2 * W0)
    Cout = p["w1"].shape[-1]

    x = jnp.transpose(x_nchw, (0, 2, 3, 1))                  # NCHW -> NHWC
    idx = jnp.transpose(idx_nchw, (0, 2, 3, 1)).astype(jnp.int32)

    up_pad = max_unpool2x2_padded(x, idx)                    # (B, H+4, W+4, Cin) bf16

    s1, t1 = _fold_bn(p["b1"], p["g1"], p["be1"], p["m1"], p["v1"])
    s2, t2 = _fold_bn(p["b2"], p["g2"], p["be2"], p["m2"], p["v2"])
    # fold the BN scale into the conv weights (the scaling rides the MXU)
    w1f = (p["w1"] * s1).reshape(9 * Cin, Cout).astype(jnp.bfloat16)
    w2f = (p["w2"] * s2).reshape(9 * Cout, Cout).astype(jnp.bfloat16)
    t1r = t1.reshape(1, Cout).astype(jnp.float32)
    t2r = t2.reshape(1, Cout).astype(jnp.float32)

    y = fused_conv_bn_relu_x2(up_pad, w1f, t1r, w2f, t2r)    # (B,H,W,Cout) bf16
    return jnp.transpose(y.astype(jnp.float32), (0, 3, 1, 2))  # NHWC -> NCHW


# ----------------------------------------------------------------------------
# Deterministic parameter init + pure-JAX f32 reference for verification
# ----------------------------------------------------------------------------
def init_params(key, cin, cout):
    ks = jax.random.split(key, 12)
    return {
        "w1": 0.1 * jax.random.normal(ks[0], (3, 3, cin, cout), jnp.float32),
        "b1": 0.05 * jax.random.normal(ks[1], (cout,), jnp.float32),
        "g1": 1.0 + 0.1 * jax.random.normal(ks[2], (cout,), jnp.float32),
        "be1": 0.1 * jax.random.normal(ks[3], (cout,), jnp.float32),
        "m1": 0.05 * jax.random.normal(ks[4], (cout,), jnp.float32),
        "v1": 1.0 + 0.1 * jnp.abs(jax.random.normal(ks[5], (cout,), jnp.float32)),
        "w2": 0.1 * jax.random.normal(ks[6], (3, 3, cout, cout), jnp.float32),
        "b2": 0.05 * jax.random.normal(ks[7], (cout,), jnp.float32),
        "g2": 1.0 + 0.1 * jax.random.normal(ks[8], (cout,), jnp.float32),
        "be2": 0.1 * jax.random.normal(ks[9], (cout,), jnp.float32),
        "m2": 0.05 * jax.random.normal(ks[10], (cout,), jnp.float32),
        "v2": 1.0 + 0.1 * jnp.abs(jax.random.normal(ks[11], (cout,), jnp.float32)),
    }


def reference_forward(x_nchw, idx_nchw, output_size, p):
    B, Cin, H0, W0 = x_nchw.shape
    Hout, Wout = int(output_size[-2]), int(output_size[-1])
    x = jnp.transpose(x_nchw, (0, 2, 3, 1))
    idx = jnp.transpose(idx_nchw, (0, 2, 3, 1))
    b_ids = jnp.arange(B)[:, None, None, None]
    c_ids = jnp.arange(Cin)[None, None, None, :]
    up = jnp.zeros((B, Hout * Wout, Cin), x.dtype).at[b_ids, idx, c_ids].set(x)
    up = up.reshape(B, Hout, Wout, Cin)

    def block(y, w, b, g, be, m, v):
        z = lax.conv_general_dilated(
            y, w, (1, 1), "SAME",
            dimension_numbers=("NHWC", "HWIO", "NHWC")) + b
        z = (z - m) / jnp.sqrt(v + EPS) * g + be
        return jnp.maximum(z, 0.0)

    y = block(up, p["w1"], p["b1"], p["g1"], p["be1"], p["m1"], p["v1"])
    y = block(y, p["w2"], p["b2"], p["g2"], p["be2"], p["m2"], p["v2"])
    return jnp.transpose(y, (0, 3, 1, 2))


if __name__ == "__main__":
    B, Cin, Cout, H0, W0 = 2, 4, 8, 16, 16
    key = jax.random.PRNGKey(0)
    kx, kdi, kdj, kp = jax.random.split(key, 4)

    x = jax.random.normal(kx, (B, Cin, H0, W0), jnp.float32)

    # MaxPool2d-consistent indices: each pooled pixel points into its 2x2 window
    di = jax.random.bernoulli(kdi, 0.5, (B, Cin, H0, W0)).astype(jnp.int32)
    dj = jax.random.bernoulli(kdj, 0.5, (B, Cin, H0, W0)).astype(jnp.int32)
    ii = jnp.arange(H0).reshape(1, 1, H0, 1)
    jj = jnp.arange(W0).reshape(1, 1, 1, W0)
    idx = (2 * ii + di) * (2 * W0) + (2 * jj + dj)            # (B,Cin,H0,W0) i32

    output_size = (B, Cin, 2 * H0, 2 * W0)
    params = init_params(kp, Cin, Cout)

    out = decoder1_forward(x, idx, output_size, params)
    jax.block_until_ready(out)

    ref = reference_forward(x, idx, output_size, params)
    assert out.shape == (B, Cout, 2 * H0, 2 * W0)
    # bf16 conv operands, bf16 inter-layer activation and bf16 output vs f32 ref
    assert jnp.allclose(out, ref, rtol=4e-2, atol=4e-2), "mismatch vs reference"

    print("KERNEL_OK")
</pallas_src>

<mosaic_0001>
module attributes {stable_mosaic.version = 11 : i64} {
  func.func @_unpool_kernel(%arg0: i32, %arg1: memref<1x18x18x4xf32, #tpu.memory_space<vmem>>, %arg2: memref<1x18x18x4xi32, #tpu.memory_space<vmem>>, %arg3: memref<1x18x2x18x8xbf16, #tpu.memory_space<vmem>>) attributes {dimension_semantics = [#tpu.dimension_semantics<parallel>], iteration_bounds = array<i64: 2>, scalar_prefetch = 0 : i64, scratch_operands = 0 : i64, tpu.core_type = #tpu.core_type<tc>, window_params = [{transform_indices = @transform_0, window_bounds = array<i64: 1, 18, 18, 4>}, {transform_indices = @transform_1, window_bounds = array<i64: 1, 18, 18, 4>}, {transform_indices = @transform_2, window_bounds = array<i64: 1, 18, 2, 18, 8>}]} {
    %c0 = arith.constant 0 : index
    %c0_0 = arith.constant 0 : index
    %c0_1 = arith.constant 0 : index
    %c0_2 = arith.constant 0 : index
    %0 = vector.load %arg1[%c0, %c0_0, %c0_1, %c0_2] : memref<1x18x18x4xf32, #tpu.memory_space<vmem>>, vector<1x18x18x4xf32>
    %1 = vector.shape_cast %0 : vector<1x18x18x4xf32> to vector<18x18x4xf32>
    %c0_3 = arith.constant 0 : index
    %c0_4 = arith.constant 0 : index
    %c0_5 = arith.constant 0 : index
    %c0_6 = arith.constant 0 : index
    %2 = vector.load %arg2[%c0_3, %c0_4, %c0_5, %c0_6] : memref<1x18x18x4xi32, #tpu.memory_space<vmem>>, vector<1x18x18x4xi32>
    %3 = vector.shape_cast %2 : vector<1x18x18x4xi32> to vector<18x18x4xi32>
    %4 = tpu.iota {dimensions = array<i32: 0>} : vector<18x18x4xi32>
    %c1_i32 = arith.constant 1 : i32
    %5 = vector.broadcast %c1_i32 : i32 to vector<18x18x4xi32>
    %6 = arith.subi %4, %5 : vector<18x18x4xi32>
    %7 = tpu.iota {dimensions = array<i32: 1>} : vector<18x18x4xi32>
    %c1_i32_7 = arith.constant 1 : i32
    %8 = vector.broadcast %c1_i32_7 : i32 to vector<18x18x4xi32>
    %9 = arith.subi %7, %8 : vector<18x18x4xi32>
    %c2_i32 = arith.constant 2 : i32
    %10 = vector.broadcast %c2_i32 : i32 to vector<18x18x4xi32>
    %11 = arith.muli %10, %6 : vector<18x18x4xi32>
    %c32_i32 = arith.constant 32 : i32
    %12 = vector.broadcast %c32_i32 : i32 to vector<18x18x4xi32>
    %13 = arith.muli %11, %12 : vector<18x18x4xi32>
    %c2_i32_8 = arith.constant 2 : i32
    %14 = vector.broadcast %c2_i32_8 : i32 to vector<18x18x4xi32>
    %15 = arith.muli %14, %9 : vector<18x18x4xi32>
    %16 = arith.addi %13, %15 : vector<18x18x4xi32>
    %17 = arith.subi %3, %16 : vector<18x18x4xi32>
    %cst = arith.constant 0.000000e+00 : f32
    %18 = vector.broadcast %cst : f32 to vector<18x18x4xf32>
    %c0_i32 = arith.constant 0 : i32
    %19 = vector.broadcast %c0_i32 : i32 to vector<18x18x4xi32>
    %20 = arith.cmpi eq, %17, %19 : vector<18x18x4xi32>
    %21 = arith.select %20, %1, %18 : vector<18x18x4xi1>, vector<18x18x4xf32>
    %c1_i32_9 = arith.constant 1 : i32
    %22 = vector.broadcast %c1_i32_9 : i32 to vector<18x18x4xi32>
    %23 = arith.cmpi eq, %17, %22 : vector<18x18x4xi32>
    %24 = arith.select %23, %1, %18 : vector<18x18x4xi1>, vector<18x18x4xf32>
    %25 = tpu.concatenate %21, %24 in 2 : vector<18x18x4xf32>, vector<18x18x4xf32> -> vector<18x18x8xf32>
    %26 = vector.shape_cast %25 : vector<18x18x8xf32> to vector<18x1x18x8xf32>
    %c32_i32_10 = arith.constant 32 : i32
    %27 = vector.broadcast %c32_i32_10 : i32 to vector<18x18x4xi32>
    %28 = arith.cmpi eq, %17, %27 : vector<18x18x4xi32>
    %29 = arith.select %28, %1, %18 : vector<18x18x4xi1>, vector<18x18x4xf32>
    %c33_i32 = arith.constant 33 : i32
    %30 = vector.broadcast %c33_i32 : i32 to vector<18x18x4xi32>
    %31 = arith.cmpi eq, %17, %30 : vector<18x18x4xi32>
    %32 = arith.select %31, %1, %18 : vector<18x18x4xi1>, vector<18x18x4xf32>
    %33 = tpu.concatenate %29, %32 in 2 : vector<18x18x4xf32>, vector<18x18x4xf32> -> vector<18x18x8xf32>
    %34 = vector.shape_cast %33 : vector<18x18x8xf32> to vector<18x1x18x8xf32>
    %35 = tpu.concatenate %26, %34 in 1 : vector<18x1x18x8xf32>, vector<18x1x18x8xf32> -> vector<18x2x18x8xf32>
    %36 = arith.truncf %35 : vector<18x2x18x8xf32> to vector<18x2x18x8xbf16>
    %c0_11 = arith.constant 0 : index
    %c0_12 = arith.constant 0 : index
    %c0_13 = arith.constant 0 : index
    %c0_14 = arith.constant 0 : index
    %c0_15 = arith.constant 0 : index
    %37 = vector.load %arg3[%c0_11, %c0_12, %c0_13, %c0_14, %c0_15] : memref<1x18x2x18x8xbf16, #tpu.memory_space<vmem>>, vector<1x18x2x18x8xbf16>
    %38 = vector.shape_cast %37 : vector<1x18x2x18x8xbf16> to vector<18x2x18x8xbf16>
    %39 = vector.shape_cast %36 : vector<18x2x18x8xbf16> to vector<1x18x2x18x8xbf16>
    tpu.vector_store %arg3[%c0_11, %c0_12, %c0_13, %c0_14, %c0_15], %39 {strides = array<i32>} : memref<1x18x2x18x8xbf16, #tpu.memory_space<vmem>>, vector<1x18x2x18x8xbf16>,
    return
  }
  func.func @transform_0(%arg0: i32) -> (i32, i32, i32, i32) {
    %c0_i32 = arith.constant 0 : i32
    %c0_i32_0 = arith.constant 0 : i32
    %c0_i32_1 = arith.constant 0 : i32
    %c0_i32_2 = arith.constant 0 : i32
    return %arg0, %c0_i32, %c0_i32_0, %c0_i32_1 : i32, i32, i32, i32
  }
  func.func @transform_1(%arg0: i32) -> (i32, i32, i32, i32) {
    %c0_i32 = arith.constant 0 : i32
    %c0_i32_0 = arith.constant 0 : i32
    %c0_i32_1 = arith.constant 0 : i32
    %c0_i32_2 = arith.constant 0 : i32
    return %arg0, %c0_i32, %c0_i32_0, %c0_i32_1 : i32, i32, i32, i32
  }
  func.func @transform_2(%arg0: i32) -> (i32, i32, i32, i32, i32) {
    %c0_i32 = arith.constant 0 : i32
    %c0_i32_0 = arith.constant 0 : i32
    %c0_i32_1 = arith.constant 0 : i32
    %c0_i32_2 = arith.constant 0 : i32
    %c0_i32_3 = arith.constant 0 : i32
    return %arg0, %c0_i32, %c0_i32_0, %c0_i32_1, %c0_i32_2 : i32, i32, i32, i32, i32
  }
}

</mosaic_0001>

<llo_original>
// kernel: tpu_custom_call.1
$region0: #{tpu_custom_call.1}
  #allocation0 [shape = 'u32[]', space=smem, size = 0x4, offset = 0x4, fixed_abs, tag = 'smem constant byte address 0x4 - core index']
  #allocation1 [shape = 'u32[72,128]{1,0:T(1,128)}', space=vmem, size = 0x9000, scoped, tag = 'internal scratch']
  %s0 = inlined_call_operand.vmem [shape: f32[2,18,18,4], index: 0, kind: input, shape index: {}]
  %s1 = inlined_call_operand.vmem [shape: s32[2,18,18,4], index: 1, kind: input, shape index: {}]
  %s2 = inlined_call_operand.vmem [shape: bf16[2,18,2,18,8], index: 2, kind: output, shape index: {}]
  %s3 = sld [smem:[#allocation0]]
  $region41: #{tpu_custom_call.1} parent=0
    _
  %s5 = ssub.s32 1, %s3
  %s6 = scalar_select 0, %s5, %s3
  loop: start=0, step=1, limit=4
  $region2: #{tpu_custom_call.1} parent=0 // loop_pre_header
    _
  $region3: #{tpu_custom_call.1} parent=0 // loop_header
    %s8 = sphi 0, %s12
    %p9 = scmp.ge.s32.totalorder %s8, 4
    %s18 = sphi 0, %s20
    %s21 = sphi 0, %s18
    %s22 = sphi 0, %s21
    %s38 = sphi 0, %s22
    %s44 = sphi 0, %s46
    %s47 = sphi 0, %s44
    %s48 = sphi 0, %s47
    %s64 = sphi 0, %s48
    %s70 = sphi 0, %s72
    %s73 = sphi 0, %s70
    %s74 = sphi 0, %s73
    %s90 = sphi 0, %s74
  $region4: #{tpu_custom_call.1} parent=0 // loop_header_branch
    %11 = sbr.rel (%p9) target = $region8
  $region5: #{tpu_custom_call.1} parent=0 // loop_body
    %s13 = ssub.s32 %s8, 1
    %s14 = ssub.s32 %s8, 2
    %s15 = sadd.s32 %s8, 1
    %s16 = ssub.s32 %s8, %s15
    %p17 = scmp.eq.s32.totalorder %s16, 0
    %s19 = sadd.s32 %s18, 1
    %s20 = scalar_select %p17, %s18, %s19
    %p23 = pneg %p17
    %p24 = scmp.eq.s32.totalorder %s8, 1
    %p25 = por %p23, %p24
    %p26 = scmp.ne.s32.totalorder %s18, %s21
    %p27 = scmp.eq.s32.totalorder %s8, 0
    %p28 = por %p26, %p27
    %p29 = scmp.ne.s32.totalorder %s18, %s21
    %p30 = scmp.eq.s32.totalorder %s13, 1
    %p31 = por %p29, %p30
    %p32 = scmp.ne.s32.totalorder %s21, %s22
    %p33 = scmp.eq.s32.totalorder %s13, 0
    %p34 = por %p32, %p33
    %p35 = scmp.ne.s32.totalorder %s21, %s22
    %p36 = scmp.eq.s32.totalorder %s14, 1
    %p37 = por %p35, %p36
    %p39 = scmp.ne.s32.totalorder %s22, %s38
    %p40 = scmp.eq.s32.totalorder %s14, 0
    %p41 = por %p39, %p40
    %s42 = ssub.s32 %s8, %s15
    %p43 = scmp.eq.s32.totalorder %s42, 0
    %s45 = sadd.s32 %s44, 1
    %s46 = scalar_select %p43, %s44, %s45
    %p49 = pneg %p43
    %p50 = scmp.eq.s32.totalorder %s8, 1
    %p51 = por %p49, %p50
    %p52 = scmp.ne.s32.totalorder %s44, %s47
    %p53 = scmp.eq.s32.totalorder %s8, 0
    %p54 = por %p52, %p53
    %p55 = scmp.ne.s32.totalorder %s44, %s47
    %p56 = scmp.eq.s32.totalorder %s13, 1
    %p57 = por %p55, %p56
    %p58 = scmp.ne.s32.totalorder %s47, %s48
    %p59 = scmp.eq.s32.totalorder %s13, 0
    %p60 = por %p58, %p59
    %p61 = scmp.ne.s32.totalorder %s47, %s48
    %p62 = scmp.eq.s32.totalorder %s14, 1
    %p63 = por %p61, %p62
    %p65 = scmp.ne.s32.totalorder %s48, %s64
    %p66 = scmp.eq.s32.totalorder %s14, 0
    %p67 = por %p65, %p66
    %s68 = ssub.s32 %s8, %s15
    %p69 = scmp.eq.s32.totalorder %s68, 0
    %s71 = sadd.s32 %s70, 1
    %s72 = scalar_select %p69, %s70, %s71
    %p75 = pneg %p69
    %p76 = scmp.eq.s32.totalorder %s8, 1
    %p77 = por %p75, %p76
    %p78 = scmp.ne.s32.totalorder %s70, %s73
    %p79 = scmp.eq.s32.totalorder %s8, 0
    %p80 = por %p78, %p79
    %p81 = scmp.ne.s32.totalorder %s70, %s73
    %p82 = scmp.eq.s32.totalorder %s13, 1
    %p83 = por %p81, %p82
    %p84 = scmp.ne.s32.totalorder %s73, %s74
    %p85 = scmp.eq.s32.totalorder %s13, 0
    %p86 = por %p84, %p85
    %p87 = scmp.ne.s32.totalorder %s73, %s74
    %p88 = scmp.eq.s32.totalorder %s14, 1
    %p89 = por %p87, %p88
    %p91 = scmp.ne.s32.totalorder %s74, %s90
    %p92 = scmp.eq.s32.totalorder %s14, 0
    %p93 = por %p91, %p92
    %p94 = scmp.le.s32.totalorder 1, %s8
    %p95 = scmp.lt.s32.totalorder %s8, 3
    %p96 = pnand %p94, %p95
    %p97 = pneg %p96
    // Predicated region
    $region9: #{tpu_custom_call.1} parent=5 // pred_check
      _
    $region10: #{tpu_custom_call.1} parent=5 // pred_check_branch
      %99 = sbr.rel (%p96) target = $region12
    $region11: #{tpu_custom_call.1} parent=5 // pred_region
      %s100 = ssub.s32 %s8, 1
    $region12: #{tpu_custom_call.1} parent=5 // pred_fallthru
      _
    %p101 = scmp.lt.s32.totalorder %s8, 2
    // Predicated region
    $region13: #{tpu_custom_call.1} parent=5 // pred_check
      %p102 = pneg %p101
    $region14: #{tpu_custom_call.1} parent=5 // pred_check_branch
      %104 = sbr.rel (%p102) target = $region16
    $region15: #{tpu_custom_call.1} parent=5 // pred_region
      // Predicated region
      $region17: #{tpu_custom_call.1} parent=15 // pred_check
        %p105 = pneg %p28
      $region18: #{tpu_custom_call.1} parent=15 // pred_check_branch
        %107 = sbr.rel (%p105) target = $region20
      $region19: #{tpu_custom_call.1} parent=15 // pred_region
        %p108 = scmp.lt.s32.totalorder %s8, 1
        %s109 = scalar_select %p108, %s8, 1
        %s110 = smul.addr %s109, 54
        %s111 = smul.addr %s110, 8
        %s112 = scalar_lea.vmem %s0, %s111
      $region20: #{tpu_custom_call.1} parent=15 // pred_fallthru
        _
      // Predicated region
      $region21: #{tpu_custom_call.1} parent=15 // pred_check
        %p113 = pneg %p54
      $region22: #{tpu_custom_call.1} parent=15 // pred_check_branch
        %115 = sbr.rel (%p113) target = $region24
      $region23: #{tpu_custom_call.1} parent=15 // pred_region
        %p116 = scmp.lt.s32.totalorder %s8, 1
        %s117 = scalar_select %p116, %s8, 1
        %s118 = smul.addr %s117, 54
        %s119 = smul.addr %s118, 8
        %s120 = scalar_lea.vmem %s1, %s119
      $region24: #{tpu_custom_call.1} parent=15 // pred_fallthru
        _
    $region16: #{tpu_custom_call.1} parent=5 // pred_fallthru
      _
    %p121 = scmp.le.s32.totalorder 1, %s8
    %p122 = scmp.lt.s32.totalorder %s8, 3
    %p123 = pnand %p121, %p122
    %p124 = pneg %p123
    // Predicated region
    $region25: #{tpu_custom_call.1} parent=5 // pred_check
      _
    $region26: #{tpu_custom_call.1} parent=5 // pred_check_branch
      %126 = sbr.rel (%p123) target = $region28
    $region27: #{tpu_custom_call.1} parent=5 // pred_region
      %s127 = ssub.s32 %s8, 1
      %p128 = scmp.lt.s32.totalorder %s13, 1
      %s129 = scalar_select %p128, %s13, 1
      %s130 = smul.addr %s129, 54
      %s131 = smul.addr %s130, 8
      %s132 = scalar_lea.vmem %s0, %s131
      %p133 = pneg %p34
      %p134 = pneg %p31
      %p135 = scmp.lt.s32.totalorder %s13, 1
      %s136 = scalar_select %p135, %s13, 1
      %s137 = smul.addr %s136, 54
      %s138 = smul.addr %s137, 8
      %s139 = scalar_lea.vmem %s1, %s138
      %p140 = pneg %p60
      %p141 = pneg %p57
      %p142 = pneg %p86
      %p143 = pneg %p83
      %p144 = scmp.lt.s32.totalorder %s13, 1
      %s145 = scalar_select %p144, %s13, 1
      %s146 = smul.addr %s145, 108
      %s147 = smul.addr %s146, 4
      %s148 = scalar_lea.vmem %s2, %s147
      %p149 = scmp.lt.s32.totalorder %s13, 1
      %s150 = scalar_select %p149, %s13, 1
      %s151 = smul.addr %s150, 54
      %s152 = smul.addr %s151, 8
      %s153 = scalar_lea.vmem %s0, %s152
      %p154 = scmp.lt.s32.totalorder %s13, 1
      %s155 = scalar_select %p154, %s13, 1
      %s156 = smul.addr %s155, 54
      %s157 = smul.addr %s156, 8
      %s158 = scalar_lea.vmem %s1, %s157
      %p159 = scmp.lt.s32.totalorder %s13, 1
      %s160 = scalar_select %p159, %s13, 1
      %s161 = smul.addr %s160, 108
      %s162 = smul.addr %s161, 4
      %s163 = scalar_lea.vmem %s2, %s162
      %v164 = vld [vmem:[%s153] sm:$0xff]
      %v165 = vld [vmem:[%s153 + $0x8] sm:$0xff]
      %v166 = vld [vmem:[%s153 + $0x10] sm:$0x3]
      %v167 = vld [vmem:[%s153 + $0x18] sm:$0xff]
      %v168 = vld [vmem:[%s153 + $0x20] sm:$0xff]
      %v169 = vld [vmem:[%s153 + $0x28] sm:$0x3]
      %v170 = vld [vmem:[%s153 + $0x30] sm:$0xff]
      %v171 = vld [vmem:[%s153 + $0x38] sm:$0xff]
      %v172 = vld [vmem:[%s153 + $0x40] sm:$0x3]
      %v173 = vld [vmem:[%s153 + $0x48] sm:$0xff]
      %v174 = vld [vmem:[%s153 + $0x50] sm:$0xff]
      %v175 = vld [vmem:[%s153 + $0x58] sm:$0x3]
      %v176 = vld [vmem:[%s153 + $0x60] sm:$0xff]
      %v177 = vld [vmem:[%s153 + $0x68] sm:$0xff]
      %v178 = vld [vmem:[%s153 + $0x70] sm:$0x3]
      %v179 = vld [vmem:[%s153 + $0x78] sm:$0xff]
      %v180 = vld [vmem:[%s153 + $0x80] sm:$0xff]
      %v181 = vld [vmem:[%s153 + $0x88] sm:$0x3]
      %v182 = vld [vmem:[%s153 + $0x90] sm:$0xff]
      %v183 = vld [vmem:[%s153 + $0x98] sm:$0xff]
      %v184 = vld [vmem:[%s153 + $0xa0] sm:$0x3]
      %v185 = vld [vmem:[%s153 + $0xa8] sm:$0xff]
      %v186 = vld [vmem:[%s153 + $0xb0] sm:$0xff]
      %v187 = vld [vmem:[%s153 + $0xb8] sm:$0x3]
      %v188 = vld [vmem:[%s153 + $0xc0] sm:$0xff]
      %v189 = vld [vmem:[%s153 + $0xc8] sm:$0xff]
      %v190 = vld [vmem:[%s153 + $0xd0] sm:$0x3]
      %v191 = vld [vmem:[%s153 + $0xd8] sm:$0xff]
      %v192 = vld [vmem:[%s153 + $0xe0] sm:$0xff]
      %v193 = vld [vmem:[%s153 + $0xe8] sm:$0x3]
      %v194 = vld [vmem:[%s153 + $0xf0] sm:$0xff]
      %v195 = vld [vmem:[%s153 + $0xf8] sm:$0xff]
      %v196 = vld [vmem:[%s153 + $0x100] sm:$0x3]
      %v197 = vld [vmem:[%s153 + $0x108] sm:$0xff]
      %v198 = vld [vmem:[%s153 + $0x110] sm:$0xff]
      %v199 = vld [vmem:[%s153 + $0x118] sm:$0x3]
      %v200 = vld [vmem:[%s153 + $0x120] sm:$0xff]
      %v201 = vld [vmem:[%s153 + $0x128] sm:$0xff]
      %v202 = vld [vmem:[%s153 + $0x130] sm:$0x3]
      %v203 = vld [vmem:[%s153 + $0x138] sm:$0xff]
      %v204 = vld [vmem:[%s153 + $0x140] sm:$0xff]
      %v205 = vld [vmem:[%s153 + $0x148] sm:$0x3]
      %v206 = vld [vmem:[%s153 + $0x150] sm:$0xff]
      %v207 = vld [vmem:[%s153 + $0x158] sm:$0xff]
      %v208 = vld [vmem:[%s153 + $0x160] sm:$0x3]
      %v209 = vld [vmem:[%s153 + $0x168] sm:$0xff]
      %v210 = vld [vmem:[%s153 + $0x170] sm:$0xff]
      %v211 = vld [vmem:[%s153 + $0x178] sm:$0x3]
      %v212 = vld [vmem:[%s153 + $0x180] sm:$0xff]
      %v213 = vld [vmem:[%s153 + $0x188] sm:$0xff]
      %v214 = vld [vmem:[%s153 + $0x190] sm:$0x3]
      %v215 = vld [vmem:[%s153 + $0x198] sm:$0xff]
      %v216 = vld [vmem:[%s153 + $0x1a0] sm:$0xff]
      %v217 = vld [vmem:[%s153 + $0x1a8] sm:$0x3]
      %v218 = vld [vmem:[%s158] sm:$0xff]
      %v219 = vld [vmem:[%s158 + $0x8] sm:$0xff]
      %v220 = vld [vmem:[%s158 + $0x10] sm:$0x3]
      %v221 = vld [vmem:[%s158 + $0x18] sm:$0xff]
      %v222 = vld [vmem:[%s158 + $0x20] sm:$0xff]
      %v223 = vld [vmem:[%s158 + $0x28] sm:$0x3]
      %v224 = vld [vmem:[%s158 + $0x30] sm:$0xff]
      %v225 = vld [vmem:[%s158 + $0x38] sm:$0xff]
      %v226 = vld [vmem:[%s158 + $0x40] sm:$0x3]
      %v227 = vld [vmem:[%s158 + $0x48] sm:$0xff]
      %v228 = vld [vmem:[%s158 + $0x50] sm:$0xff]
      %v229 = vld [vmem:[%s158 + $0x58] sm:$0x3]
      %v230 = vld [vmem:[%s158 + $0x60] sm:$0xff]
      %v231 = vld [vmem:[%s158 + $0x68] sm:$0xff]
      %v232 = vld [vmem:[%s158 + $0x70] sm:$0x3]
      %v233 = vld [vmem:[%s158 + $0x78] sm:$0xff]
      %v234 = vld [vmem:[%s158 + $0x80] sm:$0xff]
      %v235 = vld [vmem:[%s158 + $0x88] sm:$0x3]
      %v236 = vld [vmem:[%s158 + $0x90] sm:$0xff]
      %v237 = vld [vmem:[%s158 + $0x98] sm:$0xff]
      %v238 = vld [vmem:[%s158 + $0xa0] sm:$0x3]
      %v239 = vld [vmem:[%s158 + $0xa8] sm:$0xff]
      %v240 = vld [vmem:[%s158 + $0xb0] sm:$0xff]
      %v241 = vld [vmem:[%s158 + $0xb8] sm:$0x3]
      %v242 = vld [vmem:[%s158 + $0xc0] sm:$0xff]
      %v243 = vld [vmem:[%s158 + $0xc8] sm:$0xff]
      %v244 = vld [vmem:[%s158 + $0xd0] sm:$0x3]
      %v245 = vld [vmem:[%s158 + $0xd8] sm:$0xff]
      %v246 = vld [vmem:[%s158 + $0xe0] sm:$0xff]
      %v247 = vld [vmem:[%s158 + $0xe8] sm:$0x3]
      %v248 = vld [vmem:[%s158 + $0xf0] sm:$0xff]
      %v249 = vld [vmem:[%s158 + $0xf8] sm:$0xff]
      %v250 = vld [vmem:[%s158 + $0x100] sm:$0x3]
      %v251 = vld [vmem:[%s158 + $0x108] sm:$0xff]
      %v252 = vld [vmem:[%s158 + $0x110] sm:$0xff]
      %v253 = vld [vmem:[%s158 + $0x118] sm:$0x3]
      %v254 = vld [vmem:[%s158 + $0x120] sm:$0xff]
      %v255 = vld [vmem:[%s158 + $0x128] sm:$0xff]
      %v256 = vld [vmem:[%s158 + $0x130] sm:$0x3]
      %v257 = vld [vmem:[%s158 + $0x138] sm:$0xff]
      %v258 = vld [vmem:[%s158 + $0x140] sm:$0xff]
      %v259 = vld [vmem:[%s158 + $0x148] sm:$0x3]
      %v260 = vld [vmem:[%s158 + $0x150] sm:$0xff]
      %v261 = vld [vmem:[%s158 + $0x158] sm:$0xff]
      %v262 = vld [vmem:[%s158 + $0x160] sm:$0x3]
      %v263 = vld [vmem:[%s158 + $0x168] sm:$0xff]
      %v264 = vld [vmem:[%s158 + $0x170] sm:$0xff]
      %v265 = vld [vmem:[%s158 + $0x178] sm:$0x3]
      %v266 = vld [vmem:[%s158 + $0x180] sm:$0xff]
      %v267 = vld [vmem:[%s158 + $0x188] sm:$0xff]
      %v268 = vld [vmem:[%s158 + $0x190] sm:$0x3]
      %v269 = vld [vmem:[%s158 + $0x198] sm:$0xff]
      %v270 = vld [vmem:[%s158 + $0x1a0] sm:$0xff]
      %v271 = vld [vmem:[%s158 + $0x1a8] sm:$0x3]
      %v272 = vlaneseq
      %v273 = vshrl.u32 %v272, 7
      %v274 = vadd.s32 %v273, 8
      %v275 = vadd.s32 %v273, 16
      %v276 = vsub.s32 %v273, 1
      %v277 = vsub.s32 %v274, 1
      %v278 = vsub.s32 %v275, 1
      %v279 = vmul.u32 %v276, 2
      %v280 = vmul.u32 %v277, 2
      %v281 = vmul.u32 %v278, 2
      %v282 = vadd.s32 %v279, 4294967232
      %v283 = vadd.s32 %v280, 4294967232
      %v284 = vadd.s32 %v281, 4294967232
      %v285 = vadd.s32 %v279, 64
      %v286 = vadd.s32 %v280, 64
      %v287 = vadd.s32 %v281, 64
      %v288 = vadd.s32 %v279, 128
      %v289 = vadd.s32 %v280, 128
      %v290 = vadd.s32 %v281, 128
      %v291 = vadd.s32 %v279, 192
      %v292 = vadd.s32 %v280, 192
      %v293 = vadd.s32 %v281, 192
      %v294 = vadd.s32 %v279, 256
      %v295 = vadd.s32 %v280, 256
      %v296 = vadd.s32 %v281, 256
      %v297 = vadd.s32 %v279, 320
      %v298 = vadd.s32 %v280, 320
      %v299 = vadd.s32 %v281, 320
      %v300 = vadd.s32 %v279, 384
      %v301 = vadd.s32 %v280, 384
      %v302 = vadd.s32 %v281, 384
      %v303 = vadd.s32 %v279, 448
      %v304 = vadd.s32 %v280, 448
      %v305 = vadd.s32 %v281, 448
      %v306 = vadd.s32 %v279, 512
      %v307 = vadd.s32 %v280, 512
      %v308 = vadd.s32 %v281, 512
      %v309 = vadd.s32 %v279, 576
      %v310 = vadd.s32 %v280, 576
      %v311 = vadd.s32 %v281, 576
      %v312 = vadd.s32 %v279, 640
      %v313 = vadd.s32 %v280, 640
      %v314 = vadd.s32 %v281, 640
      %v315 = vadd.s32 %v279, 704
      %v316 = vadd.s32 %v280, 704
      %v317 = vadd.s32 %v281, 704
      %v318 = vadd.s32 %v279, 768
      %v319 = vadd.s32 %v280, 768
      %v320 = vadd.s32 %v281, 768
      %v321 = vadd.s32 %v279, 832
      %v322 = vadd.s32 %v280, 832
      %v323 = vadd.s32 %v281, 832
      %v324 = vadd.s32 %v279, 896
      %v325 = vadd.s32 %v280, 896
      %v326 = vadd.s32 %v281, 896
      %v327 = vadd.s32 %v279, 960
      %v328 = vadd.s32 %v280, 960
      %v329 = vadd.s32 %v281, 960
      %v330 = vadd.s32 %v279, 1024
      %v331 = vadd.s32 %v280, 1024
      %v332 = vadd.s32 %v281, 1024
      %v333 = vsub.s32 %v218, %v282
      %v334 = vsub.s32 %v219, %v283
      %v335 = vsub.s32 %v220, %v284
      %v336 = vsub.s32 %v221, %v279
      %v337 = vsub.s32 %v222, %v280
      %v338 = vsub.s32 %v223, %v281
      %v339 = vsub.s32 %v224, %v285
      %v340 = vsub.s32 %v225, %v286
      %v341 = vsub.s32 %v226, %v287
      %v342 = vsub.s32 %v227, %v288
      %v343 = vsub.s32 %v228, %v289
      %v344 = vsub.s32 %v229, %v290
      %v345 = vsub.s32 %v230, %v291
      %v346 = vsub.s32 %v231, %v292
      %v347 = vsub.s32 %v232, %v293
      %v348 = vsub.s32 %v233, %v294
      %v349 = vsub.s32 %v234, %v295
      %v350 = vsub.s32 %v235, %v296
      %v351 = vsub.s32 %v236, %v297
      %v352 = vsub.s32 %v237, %v298
      %v353 = vsub.s32 %v238, %v299
      %v354 = vsub.s32 %v239, %v300
      %v355 = vsub.s32 %v240, %v301
      %v356 = vsub.s32 %v241, %v302
      %v357 = vsub.s32 %v242, %v303
      %v358 = vsub.s32 %v243, %v304
      %v359 = vsub.s32 %v244, %v305
      %v360 = vsub.s32 %v245, %v306
      %v361 = vsub.s32 %v246, %v307
      %v362 = vsub.s32 %v247, %v308
      %v363 = vsub.s32 %v248, %v309
      %v364 = vsub.s32 %v249, %v310
      %v365 = vsub.s32 %v250, %v311
      %v366 = vsub.s32 %v251, %v312
      %v367 = vsub.s32 %v252, %v313
      %v368 = vsub.s32 %v253, %v314
      %v369 = vsub.s32 %v254, %v315
      %v370 = vsub.s32 %v255, %v316
      %v371 = vsub.s32 %v256, %v317
      %v372 = vsub.s32 %v257, %v318
      %v373 = vsub.s32 %v258, %v319
      %v374 = vsub.s32 %v259, %v320
      %v375 = vsub.s32 %v260, %v321
      %v376 = vsub.s32 %v261, %v322
      %v377 = vsub.s32 %v262, %v323
      %v378 = vsub.s32 %v263, %v324
      %v379 = vsub.s32 %v264, %v325
      %v380 = vsub.s32 %v265, %v326
      %v381 = vsub.s32 %v266, %v327
      %v382 = vsub.s32 %v267, %v328
      %v383 = vsub.s32 %v268, %v329
      %v384 = vsub.s32 %v269, %v330
      %v385 = vsub.s32 %v270, %v331
      %v386 = vsub.s32 %v271, %v332
      %vm387 = vcmp.eq.s32.totalorder %v333, 0
      %vm388 = vcmp.eq.s32.totalorder %v334, 0
      %vm389 = vcmp.eq.s32.totalorder %v335, 0
      %vm390 = vcmp.eq.s32.totalorder %v336, 0
      %vm391 = vcmp.eq.s32.totalorder %v337, 0
      %vm392 = vcmp.eq.s32.totalorder %v338, 0
      %vm393 = vcmp.eq.s32.totalorder %v339, 0
      %vm394 = vcmp.eq.s32.totalorder %v340, 0
      %vm395 = vcmp.eq.s32.totalorder %v341, 0
      %vm396 = vcmp.eq.s32.totalorder %v342, 0
      %vm397 = vcmp.eq.s32.totalorder %v343, 0
      %vm398 = vcmp.eq.s32.totalorder %v344, 0
      %vm399 = vcmp.eq.s32.totalorder %v345, 0
      %vm400 = vcmp.eq.s32.totalorder %v346, 0
      %vm401 = vcmp.eq.s32.totalorder %v347, 0
      %vm402 = vcmp.eq.s32.totalorder %v348, 0
      %vm403 = vcmp.eq.s32.totalorder %v349, 0
      %vm404 = vcmp.eq.s32.totalorder %v350, 0
      %vm405 = vcmp.eq.s32.totalorder %v351, 0
      %vm406 = vcmp.eq.s32.totalorder %v352, 0
      %vm407 = vcmp.eq.s32.totalorder %v353, 0
      %vm408 = vcmp.eq.s32.totalorder %v354, 0
      %vm409 = vcmp.eq.s32.totalorder %v355, 0
      %vm410 = vcmp.eq.s32.totalorder %v356, 0
      %vm411 = vcmp.eq.s32.totalorder %v357, 0
      %vm412 = vcmp.eq.s32.totalorder %v358, 0
      %vm413 = vcmp.eq.s32.totalorder %v359, 0
      %vm414 = vcmp.eq.s32.totalorder %v360, 0
      %vm415 = vcmp.eq.s32.totalorder %v361, 0
      %vm416 = vcmp.eq.s32.totalorder %v362, 0
      %vm417 = vcmp.eq.s32.totalorder %v363, 0
      %vm418 = vcmp.eq.s32.totalorder %v364, 0
      %vm419 = vcmp.eq.s32.totalorder %v365, 0
      %vm420 = vcmp.eq.s32.totalorder %v366, 0
      %vm421 = vcmp.eq.s32.totalorder %v367, 0
      %vm422 = vcmp.eq.s32.totalorder %v368, 0
      %vm423 = vcmp.eq.s32.totalorder %v369, 0
      %vm424 = vcmp.eq.s32.totalorder %v370, 0
      %vm425 = vcmp.eq.s32.totalorder %v371, 0
      %vm426 = vcmp.eq.s32.totalorder %v372, 0
      %vm427 = vcmp.eq.s32.totalorder %v373, 0
      %vm428 = vcmp.eq.s32.totalorder %v374, 0
      %vm429 = vcmp.eq.s32.totalorder %v375, 0
      %vm430 = vcmp.eq.s32.totalorder %v376, 0
      %vm431 = vcmp.eq.s32.totalorder %v377, 0
      %vm432 = vcmp.eq.s32.totalorder %v378, 0
      %vm433 = vcmp.eq.s32.totalorder %v379, 0
      %vm434 = vcmp.eq.s32.totalorder %v380, 0
      %vm435 = vcmp.eq.s32.totalorder %v381, 0
      %vm436 = vcmp.eq.s32.totalorder %v382, 0
      %vm437 = vcmp.eq.s32.totalorder %v383, 0
      %vm438 = vcmp.eq.s32.totalorder %v384, 0
      %vm439 = vcmp.eq.s32.totalorder %v385, 0
      %vm440 = vcmp.eq.s32.totalorder %v386, 0
      %v441 = vsel %vm387, %v164, 0.0
      %v442 = vsel %vm388, %v165, 0.0
      %v443 = vsel %vm389, %v166, 0.0
      %v444 = vsel %vm390, %v167, 0.0
      %v445 = vsel %vm391, %v168, 0.0
      %v446 = vsel %vm392, %v169, 0.0
      %v447 = vsel %vm393, %v170, 0.0
      %v448 = vsel %vm394, %v171, 0.0
      %v449 = vsel %vm395, %v172, 0.0
      %v450 = vsel %vm396, %v173, 0.0
      %v451 = vsel %vm397, %v174, 0.0
      %v452 = vsel %vm398, %v175, 0.0
      %v453 = vsel %vm399, %v176, 0.0
      %v454 = vsel %vm400, %v177, 0.0
      %v455 = vsel %vm401, %v178, 0.0
      %v456 = vsel %vm402, %v179, 0.0
      %v457 = vsel %vm403, %v180, 0.0
      %v458 = vsel %vm404, %v181, 0.0
      %v459 = vsel %vm405, %v182, 0.0
      %v460 = vsel %vm406, %v183, 0.0
      %v461 = vsel %vm407, %v184, 0.0
      %v462 = vsel %vm408, %v185, 0.0
      %v463 = vsel %vm409, %v186, 0.0
      %v464 = vsel %vm410, %v187, 0.0
      %v465 = vsel %vm411, %v188, 0.0
      %v466 = vsel %vm412, %v189, 0.0
      %v467 = vsel %vm413, %v190, 0.0
      %v468 = vsel %vm414, %v191, 0.0
      %v469 = vsel %vm415, %v192, 0.0
      %v470 = vsel %vm416, %v193, 0.0
      %v471 = vsel %vm417, %v194, 0.0
      %v472 = vsel %vm418, %v195, 0.0
      %v473 = vsel %vm419, %v196, 0.0
      %v474 = vsel %vm420, %v197, 0.0
      %v475 = vsel %vm421, %v198, 0.0
      %v476 = vsel %vm422, %v199, 0.0
      %v477 = vsel %vm423, %v200, 0.0
      %v478 = vsel %vm424, %v201, 0.0
      %v479 = vsel %vm425, %v202, 0.0
      %v480 = vsel %vm426, %v203, 0.0
      %v481 = vsel %vm427, %v204, 0.0
      %v482 = vsel %vm428, %v205, 0.0
      %v483 = vsel %vm429, %v206, 0.0
      %v484 = vsel %vm430, %v207, 0.0
      %v485 = vsel %vm431, %v208, 0.0
      %v486 = vsel %vm432, %v209, 0.0
      %v487 = vsel %vm433, %v210, 0.0
      %v488 = vsel %vm434, %v211, 0.0
      %v489 = vsel %vm435, %v212, 0.0
      %v490 = vsel %vm436, %v213, 0.0
      %v491 = vsel %vm437, %v214, 0.0
      %v492 = vsel %vm438, %v215, 0.0
      %v493 = vsel %vm439, %v216, 0.0
      %v494 = vsel %vm440, %v217, 0.0
      %vm495 = vcmp.eq.s32.totalorder %v333, 1
      %vm496 = vcmp.eq.s32.totalorder %v334, 1
      %vm497 = vcmp.eq.s32.totalorder %v335, 1
      %vm498 = vcmp.eq.s32.totalorder %v336, 1
      %vm499 = vcmp.eq.s32.totalorder %v337, 1
      %vm500 = vcmp.eq.s32.totalorder %v338, 1
      %vm501 = vcmp.eq.s32.totalorder %v339, 1
      %vm502 = vcmp.eq.s32.totalorder %v340, 1
      %vm503 = vcmp.eq.s32.totalorder %v341, 1
      %vm504 = vcmp.eq.s32.totalorder %v342, 1
      %vm505 = vcmp.eq.s32.totalorder %v343, 1
      %vm506 = vcmp.eq.s32.totalorder %v344, 1
      %vm507 = vcmp.eq.s32.totalorder %v345, 1
      %vm508 = vcmp.eq.s32.totalorder %v346, 1
      %vm509 = vcmp.eq.s32.totalorder %v347, 1
      %vm510 = vcmp.eq.s32.totalorder %v348, 1
      %vm511 = vcmp.eq.s32.totalorder %v349, 1
      %vm512 = vcmp.eq.s32.totalorder %v350, 1
      %vm513 = vcmp.eq.s32.totalorder %v351, 1
      %vm514 = vcmp.eq.s32.totalorder %v352, 1
      %vm515 = vcmp.eq.s32.totalorder %v353, 1
      %vm516 = vcmp.eq.s32.totalorder %v354, 1
      %vm517 = vcmp.eq.s32.totalorder %v355, 1
      %vm518 = vcmp.eq.s32.totalorder %v356, 1
      %vm519 = vcmp.eq.s32.totalorder %v357, 1
      %vm520 = vcmp.eq.s32.totalorder %v358, 1
      %vm521 = vcmp.eq.s32.totalorder %v359, 1
      %vm522 = vcmp.eq.s32.totalorder %v360, 1
      %vm523 = vcmp.eq.s32.totalorder %v361, 1
      %vm524 = vcmp.eq.s32.totalorder %v362, 1
      %vm525 = vcmp.eq.s32.totalorder %v363, 1
      %vm526 = vcmp.eq.s32.totalorder %v364, 1
      %vm527 = vcmp.eq.s32.totalorder %v365, 1
      %vm528 = vcmp.eq.s32.totalorder %v366, 1
      %vm529 = vcmp.eq.s32.totalorder %v367, 1
      %vm530 = vcmp.eq.s32.totalorder %v368, 1
      %vm531 = vcmp.eq.s32.totalorder %v369, 1
      %vm532 = vcmp.eq.s32.totalorder %v370, 1
      %vm533 = vcmp.eq.s32.totalorder %v371, 1
      %vm534 = vcmp.eq.s32.totalorder %v372, 1
      %vm535 = vcmp.eq.s32.totalorder %v373, 1
      %vm536 = vcmp.eq.s32.totalorder %v374, 1
      %vm537 = vcmp.eq.s32.totalorder %v375, 1
      %vm538 = vcmp.eq.s32.totalorder %v376, 1
      %vm539 = vcmp.eq.s32.totalorder %v377, 1
      %vm540 = vcmp.eq.s32.totalorder %v378, 1
      %vm541 = vcmp.eq.s32.totalorder %v379, 1
      %vm542 = vcmp.eq.s32.totalorder %v380, 1
      %vm543 = vcmp.eq.s32.totalorder %v381, 1
      %vm544 = vcmp.eq.s32.totalorder %v382, 1
      %vm545 = vcmp.eq.s32.totalorder %v383, 1
      %vm546 = vcmp.eq.s32.totalorder %v384, 1
      %vm547 = vcmp.eq.s32.totalorder %v385, 1
      %vm548 = vcmp.eq.s32.totalorder %v386, 1
      %v549 = vsel %vm495, %v164, 0.0
      %v550 = vsel %vm496, %v165, 0.0
      %v551 = vsel %vm497, %v166, 0.0
      %v552 = vsel %vm498, %v167, 0.0
      %v553 = vsel %vm499, %v168, 0.0
      %v554 = vsel %vm500, %v169, 0.0
      %v555 = vsel %vm501, %v170, 0.0
      %v556 = vsel %vm502, %v171, 0.0
      %v557 = vsel %vm503, %v172, 0.0
      %v558 = vsel %vm504, %v173, 0.0
      %v559 = vsel %vm505, %v174, 0.0
      %v560 = vsel %vm506, %v175, 0.0
      %v561 = vsel %vm507, %v176, 0.0
      %v562 = vsel %vm508, %v177, 0.0
      %v563 = vsel %vm509, %v178, 0.0
      %v564 = vsel %vm510, %v179, 0.0
      %v565 = vsel %vm511, %v180, 0.0
      %v566 = vsel %vm512, %v181, 0.0
      %v567 = vsel %vm513, %v182, 0.0
      %v568 = vsel %vm514, %v183, 0.0
      %v569 = vsel %vm515, %v184, 0.0
      %v570 = vsel %vm516, %v185, 0.0
      %v571 = vsel %vm517, %v186, 0.0
      %v572 = vsel %vm518, %v187, 0.0
      %v573 = vsel %vm519, %v188, 0.0
      %v574 = vsel %vm520, %v189, 0.0
      %v575 = vsel %vm521, %v190, 0.0
      %v576 = vsel %vm522, %v191, 0.0
      %v577 = vsel %vm523, %v192, 0.0
      %v578 = vsel %vm524, %v193, 0.0
      %v579 = vsel %vm525, %v194, 0.0
      %v580 = vsel %vm526, %v195, 0.0
      %v581 = vsel %vm527, %v196, 0.0
      %v582 = vsel %vm528, %v197, 0.0
      %v583 = vsel %vm529, %v198, 0.0
      %v584 = vsel %vm530, %v199, 0.0
      %v585 = vsel %vm531, %v200, 0.0
      %v586 = vsel %vm532, %v201, 0.0
      %v587 = vsel %vm533, %v202, 0.0
      %v588 = vsel %vm534, %v203, 0.0
      %v589 = vsel %vm535, %v204, 0.0
      %v590 = vsel %vm536, %v205, 0.0
      %v591 = vsel %vm537, %v206, 0.0
      %v592 = vsel %vm538, %v207, 0.0
      %v593 = vsel %vm539, %v208, 0.0
      %v594 = vsel %vm540, %v209, 0.0
      %v595 = vsel %vm541, %v210, 0.0
      %v596 = vsel %vm542, %v211, 0.0
      %v597 = vsel %vm543, %v212, 0.0
      %v598 = vsel %vm544, %v213, 0.0
      %v599 = vsel %vm545, %v214, 0.0
      %v600 = vsel %vm546, %v215, 0.0
      %v601 = vsel %vm547, %v216, 0.0
      %v602 = vsel %vm548, %v217, 0.0
      %657 = vrot.lane.b32.xlu0 %v549, 4
      %v658 = vpop.permute.xlu0 %657
      %659 = vrot.lane.b32.xlu0 %v550, 4
      %v660 = vpop.permute.xlu0 %659
      %661 = vrot.lane.b32.xlu0 %v551, 4
      %v662 = vpop.permute.xlu0 %661
      %663 = vrot.lane.b32.xlu0 %v552, 4
      %v664 = vpop.permute.xlu0 %663
      %665 = vrot.lane.b32.xlu0 %v553, 4
      %v666 = vpop.permute.xlu0 %665
      %667 = vrot.lane.b32.xlu0 %v554, 4
      %v668 = vpop.permute.xlu0 %667
      %669 = vrot.lane.b32.xlu0 %v555, 4
      %v670 = vpop.permute.xlu0 %669
      %671 = vrot.lane.b32.xlu0 %v556, 4
      %v672 = vpop.permute.xlu0 %671
      %673 = vrot.lane.b32.xlu0 %v557, 4
      %v674 = vpop.permute.xlu0 %673
      %675 = vrot.lane.b32.xlu0 %v558, 4
      %v676 = vpop.permute.xlu0 %675
      %677 = vrot.lane.b32.xlu0 %v559, 4
      %v678 = vpop.permute.xlu0 %677
      %679 = vrot.lane.b32.xlu0 %v560, 4
      %v680 = vpop.permute.xlu0 %679
      %681 = vrot.lane.b32.xlu0 %v561, 4
      %v682 = vpop.permute.xlu0 %681
      %683 = vrot.lane.b32.xlu0 %v562, 4
      %v684 = vpop.permute.xlu0 %683
      %685 = vrot.lane.b32.xlu0 %v563, 4
      %v686 = vpop.permute.xlu0 %685
      %687 = vrot.lane.b32.xlu0 %v564, 4
      %v688 = vpop.permute.xlu0 %687
      %689 = vrot.lane.b32.xlu0 %v565, 4
      %v690 = vpop.permute.xlu0 %689
      %691 = vrot.lane.b32.xlu0 %v566, 4
      %v692 = vpop.permute.xlu0 %691
      %693 = vrot.lane.b32.xlu0 %v567, 4
      %v694 = vpop.permute.xlu0 %693
      %695 = vrot.lane.b32.xlu0 %v568, 4
      %v696 = vpop.permute.xlu0 %695
      %697 = vrot.lane.b32.xlu0 %v569, 4
      %v698 = vpop.permute.xlu0 %697
      %699 = vrot.lane.b32.xlu0 %v570, 4
      %v700 = vpop.permute.xlu0 %699
      %701 = vrot.lane.b32.xlu0 %v571, 4
      %v702 = vpop.permute.xlu0 %701
      %703 = vrot.lane.b32.xlu0 %v572, 4
      %v704 = vpop.permute.xlu0 %703
      %705 = vrot.lane.b32.xlu0 %v573, 4
      %v706 = vpop.permute.xlu0 %705
      %707 = vrot.lane.b32.xlu0 %v574, 4
      %v708 = vpop.permute.xlu0 %707
      %709 = vrot.lane.b32.xlu0 %v575, 4
      %v710 = vpop.permute.xlu0 %709
      %711 = vrot.lane.b32.xlu0 %v576, 4
      %v712 = vpop.permute.xlu0 %711
      %713 = vrot.lane.b32.xlu0 %v577, 4
      %v714 = vpop.permute.xlu0 %713
      %715 = vrot.lane.b32.xlu0 %v578, 4
      %v716 = vpop.permute.xlu0 %715
      %717 = vrot.lane.b32.xlu0 %v579, 4
      %v718 = vpop.permute.xlu0 %717
      %719 = vrot.lane.b32.xlu0 %v580, 4
      %v720 = vpop.permute.xlu0 %719
      %721 = vrot.lane.b32.xlu0 %v581, 4
      %v722 = vpop.permute.xlu0 %721
      %723 = vrot.lane.b32.xlu0 %v582, 4
      %v724 = vpop.permute.xlu0 %723
      %725 = vrot.lane.b32.xlu0 %v583, 4
      %v726 = vpop.permute.xlu0 %725
      %727 = vrot.lane.b32.xlu0 %v584, 4
      %v728 = vpop.permute.xlu0 %727
      %729 = vrot.lane.b32.xlu0 %v585, 4
      %v730 = vpop.permute.xlu0 %729
      %731 = vrot.lane.b32.xlu0 %v586, 4
      %v732 = vpop.permute.xlu0 %731
      %733 = vrot.lane.b32.xlu0 %v587, 4
      %v734 = vpop.permute.xlu0 %733
      %735 = vrot.lane.b32.xlu0 %v588, 4
      %v736 = vpop.permute.xlu0 %735
      %737 = vrot.lane.b32.xlu0 %v589, 4
      %v738 = vpop.permute.xlu0 %737
      %739 = vrot.lane.b32.xlu0 %v590, 4
      %v740 = vpop.permute.xlu0 %739
      %741 = vrot.lane.b32.xlu0 %v591, 4
      %v742 = vpop.permute.xlu0 %741
      %743 = vrot.lane.b32.xlu0 %v592, 4
      %v744 = vpop.permute.xlu0 %743
      %745 = vrot.lane.b32.xlu0 %v593, 4
      %v746 = vpop.permute.xlu0 %745
      %747 = vrot.lane.b32.xlu0 %v594, 4
      %v748 = vpop.permute.xlu0 %747
      %749 = vrot.lane.b32.xlu0 %v595, 4
      %v750 = vpop.permute.xlu0 %749
      %751 = vrot.lane.b32.xlu0 %v596, 4
      %v752 = vpop.permute.xlu0 %751
      %753 = vrot.lane.b32.xlu0 %v597, 4
      %v754 = vpop.permute.xlu0 %753
      %755 = vrot.lane.b32.xlu0 %v598, 4
      %v756 = vpop.permute.xlu0 %755
      %757 = vrot.lane.b32.xlu0 %v599, 4
      %v758 = vpop.permute.xlu0 %757
      %759 = vrot.lane.b32.xlu0 %v600, 4
      %v760 = vpop.permute.xlu0 %759
      %761 = vrot.lane.b32.xlu0 %v601, 4
      %v762 = vpop.permute.xlu0 %761
      %763 = vrot.lane.b32.xlu0 %v602, 4
      %v764 = vpop.permute.xlu0 %763
      %vm819 = vcmask 31744
      %v820 = vsel %vm819, %v441, %v658
      %v821 = vsel %vm819, %v442, %v660
      %v822 = vsel %vm819, %v443, %v662
      %v823 = vsel %vm819, %v444, %v664
      %v824 = vsel %vm819, %v445, %v666
      %v825 = vsel %vm819, %v446, %v668
      %v826 = vsel %vm819, %v447, %v670
      %v827 = vsel %vm819, %v448, %v672
      %v828 = vsel %vm819, %v449, %v674
      %v829 = vsel %vm819, %v450, %v676
      %v830 = vsel %vm819, %v451, %v678
      %v831 = vsel %vm819, %v452, %v680
      %v832 = vsel %vm819, %v453, %v682
      %v833 = vsel %vm819, %v454, %v684
      %v834 = vsel %vm819, %v455, %v686
      %v835 = vsel %vm819, %v456, %v688
      %v836 = vsel %vm819, %v457, %v690
      %v837 = vsel %vm819, %v458, %v692
      %v838 = vsel %vm819, %v459, %v694
      %v839 = vsel %vm819, %v460, %v696
      %v840 = vsel %vm819, %v461, %v698
      %v841 = vsel %vm819, %v462, %v700
      %v842 = vsel %vm819, %v463, %v702
      %v843 = vsel %vm819, %v464, %v704
      %v844 = vsel %vm819, %v465, %v706
      %v845 = vsel %vm819, %v466, %v708
      %v846 = vsel %vm819, %v467, %v710
      %v847 = vsel %vm819, %v468, %v712
      %v848 = vsel %vm819, %v469, %v714
      %v849 = vsel %vm819, %v470, %v716
      %v850 = vsel %vm819, %v471, %v718
      %v851 = vsel %vm819, %v472, %v720
      %v852 = vsel %vm819, %v473, %v722
      %v853 = vsel %vm819, %v474, %v724
      %v854 = vsel %vm819, %v475, %v726
      %v855 = vsel %vm819, %v476, %v728
      %v856 = vsel %vm819, %v477, %v730
      %v857 = vsel %vm819, %v478, %v732
      %v858 = vsel %vm819, %v479, %v734
      %v859 = vsel %vm819, %v480, %v736
      %v860 = vsel %vm819, %v481, %v738
      %v861 = vsel %vm819, %v482, %v740
      %v862 = vsel %vm819, %v483, %v742
      %v863 = vsel %vm819, %v484, %v744
      %v864 = vsel %vm819, %v485, %v746
      %v865 = vsel %vm819, %v486, %v748
      %v866 = vsel %vm819, %v487, %v750
      %v867 = vsel %vm819, %v488, %v752
      %v868 = vsel %vm819, %v489, %v754
      %v869 = vsel %vm819, %v490, %v756
      %v870 = vsel %vm819, %v491, %v758
      %v871 = vsel %vm819, %v492, %v760
      %v872 = vsel %vm819, %v493, %v762
      %v873 = vsel %vm819, %v494, %v764
      %vm874 = vcmp.eq.s32.totalorder %v333, 32
      %vm875 = vcmp.eq.s32.totalorder %v334, 32
      %vm876 = vcmp.eq.s32.totalorder %v335, 32
      %vm877 = vcmp.eq.s32.totalorder %v336, 32
      %vm878 = vcmp.eq.s32.totalorder %v337, 32
      %vm879 = vcmp.eq.s32.totalorder %v338, 32
      %vm880 = vcmp.eq.s32.totalorder %v339, 32
      %vm881 = vcmp.eq.s32.totalorder %v340, 32
      %vm882 = vcmp.eq.s32.totalorder %v341, 32
      %vm883 = vcmp.eq.s32.totalorder %v342, 32
      %vm884 = vcmp.eq.s32.totalorder %v343, 32
      %vm885 = vcmp.eq.s32.totalorder %v344, 32
      %vm886 = vcmp.eq.s32.totalorder %v345, 32
      %vm887 = vcmp.eq.s32.totalorder %v346, 32
      %vm888 = vcmp.eq.s32.totalorder %v347, 32
      %vm889 = vcmp.eq.s32.totalorder %v348, 32
      %vm890 = vcmp.eq.s32.totalorder %v349, 32
      %vm891 = vcmp.eq.s32.totalorder %v350, 32
      %vm892 = vcmp.eq.s32.totalorder %v351, 32
      %vm893 = vcmp.eq.s32.totalorder %v352, 32
      %vm894 = vcmp.eq.s32.totalorder %v353, 32
      %vm895 = vcmp.eq.s32.totalorder %v354, 32
      %vm896 = vcmp.eq.s32.totalorder %v355, 32
      %vm897 = vcmp.eq.s32.totalorder %v356, 32
      %vm898 = vcmp.eq.s32.totalorder %v357, 32
      %vm899 = vcmp.eq.s32.totalorder %v358, 32
      %vm900 = vcmp.eq.s32.totalorder %v359, 32
      %vm901 = vcmp.eq.s32.totalorder %v360, 32
      %vm902 = vcmp.eq.s32.totalorder %v361, 32
      %vm903 = vcmp.eq.s32.totalorder %v362, 32
      %vm904 = vcmp.eq.s32.totalorder %v363, 32
      %vm905 = vcmp.eq.s32.totalorder %v364, 32
      %vm906 = vcmp.eq.s32.totalorder %v365, 32
      %vm907 = vcmp.eq.s32.totalorder %v366, 32
      %vm908 = vcmp.eq.s32.totalorder %v367, 32
      %vm909 = vcmp.eq.s32.totalorder %v368, 32
      %vm910 = vcmp.eq.s32.totalorder %v369, 32
      %vm911 = vcmp.eq.s32.totalorder %v370, 32
      %vm912 = vcmp.eq.s32.totalorder %v371, 32
      %vm913 = vcmp.eq.s32.totalorder %v372, 32
      %vm914 = vcmp.eq.s32.totalorder %v373, 32
      %vm915 = vcmp.eq.s32.totalorder %v374, 32
      %vm916 = vcmp.eq.s32.totalorder %v375, 32
      %vm917 = vcmp.eq.s32.totalorder %v376, 32
      %vm918 = vcmp.eq.s32.totalorder %v377, 32
      %vm919 = vcmp.eq.s32.totalorder %v378, 32
      %vm920 = vcmp.eq.s32.totalorder %v379, 32
      %vm921 = vcmp.eq.s32.totalorder %v380, 32
      %vm922 = vcmp.eq.s32.totalorder %v381, 32
      %vm923 = vcmp.eq.s32.totalorder %v382, 32
      %vm924 = vcmp.eq.s32.totalorder %v383, 32
      %vm925 = vcmp.eq.s32.totalorder %v384, 32
      %vm926 = vcmp.eq.s32.totalorder %v385, 32
      %vm927 = vcmp.eq.s32.totalorder %v386, 32
      %v928 = vsel %vm874, %v164, 0.0
      %v929 = vsel %vm875, %v165, 0.0
      %v930 = vsel %vm876, %v166, 0.0
      %v931 = vsel %vm877, %v167, 0.0
      %v932 = vsel %vm878, %v168, 0.0
      %v933 = vsel %vm879, %v169, 0.0
      %v934 = vsel %vm880, %v170, 0.0
      %v935 = vsel %vm881, %v171, 0.0
      %v936 = vsel %vm882, %v172, 0.0
      %v937 = vsel %vm883, %v173, 0.0
      %v938 = vsel %vm884, %v174, 0.0
      %v939 = vsel %vm885, %v175, 0.0
      %v940 = vsel %vm886, %v176, 0.0
      %v941 = vsel %vm887, %v177, 0.0
      %v942 = vsel %vm888, %v178, 0.0
      %v943 = vsel %vm889, %v179, 0.0
      %v944 = vsel %vm890, %v180, 0.0
      %v945 = vsel %vm891, %v181, 0.0
      %v946 = vsel %vm892, %v182, 0.0
      %v947 = vsel %vm893, %v183, 0.0
      %v948 = vsel %vm894, %v184, 0.0
      %v949 = vsel %vm895, %v185, 0.0
      %v950 = vsel %vm896, %v186, 0.0
      %v951 = vsel %vm897, %v187, 0.0
      %v952 = vsel %vm898, %v188, 0.0
      %v953 = vsel %vm899, %v189, 0.0
      %v954 = vsel %vm900, %v190, 0.0
      %v955 = vsel %vm901, %v191, 0.0
      %v956 = vsel %vm902, %v192, 0.0
      %v957 = vsel %vm903, %v193, 0.0
      %v958 = vsel %vm904, %v194, 0.0
      %v959 = vsel %vm905, %v195, 0.0
      %v960 = vsel %vm906, %v196, 0.0
      %v961 = vsel %vm907, %v197, 0.0
      %v962 = vsel %vm908, %v198, 0.0
      %v963 = vsel %vm909, %v199, 0.0
      %v964 = vsel %vm910, %v200, 0.0
      %v965 = vsel %vm911, %v201, 0.0
      %v966 = vsel %vm912, %v202, 0.0
      %v967 = vsel %vm913, %v203, 0.0
      %v968 = vsel %vm914, %v204, 0.0
      %v969 = vsel %vm915, %v205, 0.0
      %v970 = vsel %vm916, %v206, 0.0
      %v971 = vsel %vm917, %v207, 0.0
      %v972 = vsel %vm918, %v208, 0.0
      %v973 = vsel %vm919, %v209, 0.0
      %v974 = vsel %vm920, %v210, 0.0
      %v975 = vsel %vm921, %v211, 0.0
      %v976 = vsel %vm922, %v212, 0.0
      %v977 = vsel %vm923, %v213, 0.0
      %v978 = vsel %vm924, %v214, 0.0
      %v979 = vsel %vm925, %v215, 0.0
      %v980 = vsel %vm926, %v216, 0.0
      %v981 = vsel %vm927, %v217, 0.0
      %vm982 = vcmp.eq.s32.totalorder %v333, 33
      %vm983 = vcmp.eq.s32.totalorder %v334, 33
      %vm984 = vcmp.eq.s32.totalorder %v335, 33
      %vm985 = vcmp.eq.s32.totalorder %v336, 33
      %vm986 = vcmp.eq.s32.totalorder %v337, 33
      %vm987 = vcmp.eq.s32.totalorder %v338, 33
      %vm988 = vcmp.eq.s32.totalorder %v339, 33
      %vm989 = vcmp.eq.s32.totalorder %v340, 33
      %vm990 = vcmp.eq.s32.totalorder %v341, 33
      %vm991 = vcmp.eq.s32.totalorder %v342, 33
      %vm992 = vcmp.eq.s32.totalorder %v343, 33
      %vm993 = vcmp.eq.s32.totalorder %v344, 33
      %vm994 = vcmp.eq.s32.totalorder %v345, 33
      %vm995 = vcmp.eq.s32.totalorder %v346, 33
      %vm996 = vcmp.eq.s32.totalorder %v347, 33
      %vm997 = vcmp.eq.s32.totalorder %v348, 33
      %vm998 = vcmp.eq.s32.totalorder %v349, 33
      %vm999 = vcmp.eq.s32.totalorder %v350, 33
      %vm1000 = vcmp.eq.s32.totalorder %v351, 33
      %vm1001 = vcmp.eq.s32.totalorder %v352, 33
      %vm1002 = vcmp.eq.s32.totalorder %v353, 33
      %vm1003 = vcmp.eq.s32.totalorder %v354, 33
      %vm1004 = vcmp.eq.s32.totalorder %v355, 33
      %vm1005 = vcmp.eq.s32.totalorder %v356, 33
      %vm1006 = vcmp.eq.s32.totalorder %v357, 33
      %vm1007 = vcmp.eq.s32.totalorder %v358, 33
      %vm1008 = vcmp.eq.s32.totalorder %v359, 33
      %vm1009 = vcmp.eq.s32.totalorder %v360, 33
      %vm1010 = vcmp.eq.s32.totalorder %v361, 33
      %vm1011 = vcmp.eq.s32.totalorder %v362, 33
      %vm1012 = vcmp.eq.s32.totalorder %v363, 33
      %vm1013 = vcmp.eq.s32.totalorder %v364, 33
      %vm1014 = vcmp.eq.s32.totalorder %v365, 33
      %vm1015 = vcmp.eq.s32.totalorder %v366, 33
      %vm1016 = vcmp.eq.s32.totalorder %v367, 33
      %vm1017 = vcmp.eq.s32.totalorder %v368, 33
      %vm1018 = vcmp.eq.s32.totalorder %v369, 33
      %vm1019 = vcmp.eq.s32.totalorder %v370, 33
      %vm1020 = vcmp.eq.s32.totalorder %v371, 33
      %vm1021 = vcmp.eq.s32.totalorder %v372, 33
      %vm1022 = vcmp.eq.s32.totalorder %v373, 33
      %vm1023 = vcmp.eq.s32.totalorder %v374, 33
      %vm1024 = vcmp.eq.s32.totalorder %v375, 33
      %vm1025 = vcmp.eq.s32.totalorder %v376, 33
      %vm1026 = vcmp.eq.s32.totalorder %v377, 33
      %vm1027 = vcmp.eq.s32.totalorder %v378, 33
      %vm1028 = vcmp.eq.s32.totalorder %v379, 33
      %vm1029 = vcmp.eq.s32.totalorder %v380, 33
      %vm1030 = vcmp.eq.s32.totalorder %v381, 33
      %vm1031 = vcmp.eq.s32.totalorder %v382, 33
      %vm1032 = vcmp.eq.s32.totalorder %v383, 33
      %vm1033 = vcmp.eq.s32.totalorder %v384, 33
      %vm1034 = vcmp.eq.s32.totalorder %v385, 33
      %vm1035 = vcmp.eq.s32.totalorder %v386, 33
      %v1036 = vsel %vm982, %v164, 0.0
      %v1037 = vsel %vm983, %v165, 0.0
      %v1038 = vsel %vm984, %v166, 0.0
      %v1039 = vsel %vm985, %v167, 0.0
      %v1040 = vsel %vm986, %v168, 0.0
      %v1041 = vsel %vm987, %v169, 0.0
      %v1042 = vsel %vm988, %v170, 0.0
      %v1043 = vsel %vm989, %v171, 0.0
      %v1044 = vsel %vm990, %v172, 0.0
      %v1045 = vsel %vm991, %v173, 0.0
      %v1046 = vsel %vm992, %v174, 0.0
      %v1047 = vsel %vm993, %v175, 0.0
      %v1048 = vsel %vm994, %v176, 0.0
      %v1049 = vsel %vm995, %v177, 0.0
      %v1050 = vsel %vm996, %v178, 0.0
      %v1051 = vsel %vm997, %v179, 0.0
      %v1052 = vsel %vm998, %v180, 0.0
      %v1053 = vsel %vm999, %v181, 0.0
      %v1054 = vsel %vm1000, %v182, 0.0
      %v1055 = vsel %vm1001, %v183, 0.0
      %v1056 = vsel %vm1002, %v184, 0.0
      %v1057 = vsel %vm1003, %v185, 0.0
      %v1058 = vsel %vm1004, %v186, 0.0
      %v1059 = vsel %vm1005, %v187, 0.0
      %v1060 = vsel %vm1006, %v188, 0.0
      %v1061 = vsel %vm1007, %v189, 0.0
      %v1062 = vsel %vm1008, %v190, 0.0
      %v1063 = vsel %vm1009, %v191, 0.0
      %v1064 = vsel %vm1010, %v192, 0.0
      %v1065 = vsel %vm1011, %v193, 0.0
      %v1066 = vsel %vm1012, %v194, 0.0
      %v1067 = vsel %vm1013, %v195, 0.0
      %v1068 = vsel %vm1014, %v196, 0.0
      %v1069 = vsel %vm1015, %v197, 0.0
      %v1070 = vsel %vm1016, %v198, 0.0
      %v1071 = vsel %vm1017, %v199, 0.0
      %v1072 = vsel %vm1018, %v200, 0.0
      %v1073 = vsel %vm1019, %v201, 0.0
      %v1074 = vsel %vm1020, %v202, 0.0
      %v1075 = vsel %vm1021, %v203, 0.0
      %v1076 = vsel %vm1022, %v204, 0.0
      %v1077 = vsel %vm1023, %v205, 0.0
      %v1078 = vsel %vm1024, %v206, 0.0
      %v1079 = vsel %vm1025, %v207, 0.0
      %v1080 = vsel %vm1026, %v208, 0.0
      %v1081 = vsel %vm1027, %v209, 0.0
      %v1082 = vsel %vm1028, %v210, 0.0
      %v1083 = vsel %vm1029, %v211, 0.0
      %v1084 = vsel %vm1030, %v212, 0.0
      %v1085 = vsel %vm1031, %v213, 0.0
      %v1086 = vsel %vm1032, %v214, 0.0
      %v1087 = vsel %vm1033, %v215, 0.0
      %v1088 = vsel %vm1034, %v216, 0.0
      %v1089 = vsel %vm1035, %v217, 0.0
      %1144 = vrot.lane.b32.xlu0 %v1036, 4
      %v1145 = vpop.permute.xlu0 %1144
      %1146 = vrot.lane.b32.xlu0 %v1037, 4
      %v1147 = vpop.permute.xlu0 %1146
      %1148 = vrot.lane.b32.xlu0 %v1038, 4
      %v1149 = vpop.permute.xlu0 %1148
      %1150 = vrot.lane.b32.xlu0 %v1039, 4
      %v1151 = vpop.permute.xlu0 %1150
      %1152 = vrot.lane.b32.xlu0 %v1040, 4
      %v1153 = vpop.permute.xlu0 %1152
      %1154 = vrot.lane.b32.xlu0 %v1041, 4
      %v1155 = vpop.permute.xlu0 %1154
      %1156 = vrot.lane.b32.xlu0 %v1042, 4
      %v1157 = vpop.permute.xlu0 %1156
      %1158 = vrot.lane.b32.xlu0 %v1043, 4
      %v1159 = vpop.permute.xlu0 %1158
      %1160 = vrot.lane.b32.xlu0 %v1044, 4
      %v1161 = vpop.permute.xlu0 %1160
      %1162 = vrot.lane.b32.xlu0 %v1045, 4
      %v1163 = vpop.permute.xlu0 %1162
      %1164 = vrot.lane.b32.xlu0 %v1046, 4
      %v1165 = vpop.permute.xlu0 %1164
      %1166 = vrot.lane.b32.xlu0 %v1047, 4
      %v1167 = vpop.permute.xlu0 %1166
      %1168 = vrot.lane.b32.xlu0 %v1048, 4
      %v1169 = vpop.permute.xlu0 %1168
      %1170 = vrot.lane.b32.xlu0 %v1049, 4
      %v1171 = vpop.permute.xlu0 %1170
      %1172 = vrot.lane.b32.xlu0 %v1050, 4
      %v1173 = vpop.permute.xlu0 %1172
      %1174 = vrot.lane.b32.xlu0 %v1051, 4
      %v1175 = vpop.permute.xlu0 %1174
      %1176 = vrot.lane.b32.xlu0 %v1052, 4
      %v1177 = vpop.permute.xlu0 %1176
      %1178 = vrot.lane.b32.xlu0 %v1053, 4
      %v1179 = vpop.permute.xlu0 %1178
      %1180 = vrot.lane.b32.xlu0 %v1054, 4
      %v1181 = vpop.permute.xlu0 %1180
      %1182 = vrot.lane.b32.xlu0 %v1055, 4
      %v1183 = vpop.permute.xlu0 %1182
      %1184 = vrot.lane.b32.xlu0 %v1056, 4
      %v1185 = vpop.permute.xlu0 %1184
      %1186 = vrot.lane.b32.xlu0 %v1057, 4
      %v1187 = vpop.permute.xlu0 %1186
      %1188 = vrot.lane.b32.xlu0 %v1058, 4
      %v1189 = vpop.permute.xlu0 %1188
      %1190 = vrot.lane.b32.xlu0 %v1059, 4
      %v1191 = vpop.permute.xlu0 %1190
      %1192 = vrot.lane.b32.xlu0 %v1060, 4
      %v1193 = vpop.permute.xlu0 %1192
      %1194 = vrot.lane.b32.xlu0 %v1061, 4
      %v1195 = vpop.permute.xlu0 %1194
      %1196 = vrot.lane.b32.xlu0 %v1062, 4
      %v1197 = vpop.permute.xlu0 %1196
      %1198 = vrot.lane.b32.xlu0 %v1063, 4
      %v1199 = vpop.permute.xlu0 %1198
      %1200 = vrot.lane.b32.xlu0 %v1064, 4
      %v1201 = vpop.permute.xlu0 %1200
      %1202 = vrot.lane.b32.xlu0 %v1065, 4
      %v1203 = vpop.permute.xlu0 %1202
      %1204 = vrot.lane.b32.xlu0 %v1066, 4
      %v1205 = vpop.permute.xlu0 %1204
      %1206 = vrot.lane.b32.xlu0 %v1067, 4
      %v1207 = vpop.permute.xlu0 %1206
      %1208 = vrot.lane.b32.xlu0 %v1068, 4
      %v1209 = vpop.permute.xlu0 %1208
      %1210 = vrot.lane.b32.xlu0 %v1069, 4
      %v1211 = vpop.permute.xlu0 %1210
      %1212 = vrot.lane.b32.xlu0 %v1070, 4
      %v1213 = vpop.permute.xlu0 %1212
      %1214 = vrot.lane.b32.xlu0 %v1071, 4
      %v1215 = vpop.permute.xlu0 %1214
      %1216 = vrot.lane.b32.xlu0 %v1072, 4
      %v1217 = vpop.permute.xlu0 %1216
      %1218 = vrot.lane.b32.xlu0 %v1073, 4
      %v1219 = vpop.permute.xlu0 %1218
      %1220 = vrot.lane.b32.xlu0 %v1074, 4
      %v1221 = vpop.permute.xlu0 %1220
      %1222 = vrot.lane.b32.xlu0 %v1075, 4
      %v1223 = vpop.permute.xlu0 %1222
      %1224 = vrot.lane.b32.xlu0 %v1076, 4
      %v1225 = vpop.permute.xlu0 %1224
      %1226 = vrot.lane.b32.xlu0 %v1077, 4
      %v1227 = vpop.permute.xlu0 %1226
      %1228 = vrot.lane.b32.xlu0 %v1078, 4
      %v1229 = vpop.permute.xlu0 %1228
      %1230 = vrot.lane.b32.xlu0 %v1079, 4
      %v1231 = vpop.permute.xlu0 %1230
      %1232 = vrot.lane.b32.xlu0 %v1080, 4
      %v1233 = vpop.permute.xlu0 %1232
      %1234 = vrot.lane.b32.xlu0 %v1081, 4
      %v1235 = vpop.permute.xlu0 %1234
      %1236 = vrot.lane.b32.xlu0 %v1082, 4
      %v1237 = vpop.permute.xlu0 %1236
      %1238 = vrot.lane.b32.xlu0 %v1083, 4
      %v1239 = vpop.permute.xlu0 %1238
      %1240 = vrot.lane.b32.xlu0 %v1084, 4
      %v1241 = vpop.permute.xlu0 %1240
      %1242 = vrot.lane.b32.xlu0 %v1085, 4
      %v1243 = vpop.permute.xlu0 %1242
      %1244 = vrot.lane.b32.xlu0 %v1086, 4
      %v1245 = vpop.permute.xlu0 %1244
      %1246 = vrot.lane.b32.xlu0 %v1087, 4
      %v1247 = vpop.permute.xlu0 %1246
      %1248 = vrot.lane.b32.xlu0 %v1088, 4
      %v1249 = vpop.permute.xlu0 %1248
      %1250 = vrot.lane.b32.xlu0 %v1089, 4
      %v1251 = vpop.permute.xlu0 %1250
      %v1306 = vsel %vm819, %v928, %v1145
      %v1307 = vsel %vm819, %v929, %v1147
      %v1308 = vsel %vm819, %v930, %v1149
      %v1309 = vsel %vm819, %v931, %v1151
      %v1310 = vsel %vm819, %v932, %v1153
      %v1311 = vsel %vm819, %v933, %v1155
      %v1312 = vsel %vm819, %v934, %v1157
      %v1313 = vsel %vm819, %v935, %v1159
      %v1314 = vsel %vm819, %v936, %v1161
      %v1315 = vsel %vm819, %v937, %v1163
      %v1316 = vsel %vm819, %v938, %v1165
      %v1317 = vsel %vm819, %v939, %v1167
      %v1318 = vsel %vm819, %v940, %v1169
      %v1319 = vsel %vm819, %v941, %v1171
      %v1320 = vsel %vm819, %v942, %v1173
      %v1321 = vsel %vm819, %v943, %v1175
      %v1322 = vsel %vm819, %v944, %v1177
      %v1323 = vsel %vm819, %v945, %v1179
      %v1324 = vsel %vm819, %v946, %v1181
      %v1325 = vsel %vm819, %v947, %v1183
      %v1326 = vsel %vm819, %v948, %v1185
      %v1327 = vsel %vm819, %v949, %v1187
      %v1328 = vsel %vm819, %v950, %v1189
      %v1329 = vsel %vm819, %v951, %v1191
      %v1330 = vsel %vm819, %v952, %v1193
      %v1331 = vsel %vm819, %v953, %v1195
      %v1332 = vsel %vm819, %v954, %v1197
      %v1333 = vsel %vm819, %v955, %v1199
      %v1334 = vsel %vm819, %v956, %v1201
      %v1335 = vsel %vm819, %v957, %v1203
      %v1336 = vsel %vm819, %v958, %v1205
      %v1337 = vsel %vm819, %v959, %v1207
      %v1338 = vsel %vm819, %v960, %v1209
      %v1339 = vsel %vm819, %v961, %v1211
      %v1340 = vsel %vm819, %v962, %v1213
      %v1341 = vsel %vm819, %v963, %v1215
      %v1342 = vsel %vm819, %v964, %v1217
      %v1343 = vsel %vm819, %v965, %v1219
      %v1344 = vsel %vm819, %v966, %v1221
      %v1345 = vsel %vm819, %v967, %v1223
      %v1346 = vsel %vm819, %v968, %v1225
      %v1347 = vsel %vm819, %v969, %v1227
      %v1348 = vsel %vm819, %v970, %v1229
      %v1349 = vsel %vm819, %v971, %v1231
      %v1350 = vsel %vm819, %v972, %v1233
      %v1351 = vsel %vm819, %v973, %v1235
      %v1352 = vsel %vm819, %v974, %v1237
      %v1353 = vsel %vm819, %v975, %v1239
      %v1354 = vsel %vm819, %v976, %v1241
      %v1355 = vsel %vm819, %v977, %v1243
      %v1356 = vsel %vm819, %v978, %v1245
      %v1357 = vsel %vm819, %v979, %v1247
      %v1358 = vsel %vm819, %v980, %v1249
      %v1359 = vsel %vm819, %v981, %v1251
      %v1360 = vpack.c.bf16 %v820, %v820
      %v1361 = vpack.c.bf16 %v821, %v821
      %v1362 = vpack.c.bf16 %v822, %v822
      %v1363 = vpack.c.bf16 %v1306, %v1306
      %v1364 = vpack.c.bf16 %v1307, %v1307
      %v1365 = vpack.c.bf16 %v1308, %v1308
      %v1366 = vpack.c.bf16 %v823, %v823
      %v1367 = vpack.c.bf16 %v824, %v824
      %v1368 = vpack.c.bf16 %v825, %v825
      %v1369 = vpack.c.bf16 %v1309, %v1309
      %v1370 = vpack.c.bf16 %v1310, %v1310
      %v1371 = vpack.c.bf16 %v1311, %v1311
      %v1372 = vpack.c.bf16 %v826, %v826
      %v1373 = vpack.c.bf16 %v827, %v827
      %v1374 = vpack.c.bf16 %v828, %v828
      %v1375 = vpack.c.bf16 %v1312, %v1312
      %v1376 = vpack.c.bf16 %v1313, %v1313
      %v1377 = vpack.c.bf16 %v1314, %v1314
      %v1378 = vpack.c.bf16 %v829, %v829
      %v1379 = vpack.c.bf16 %v830, %v830
      %v1380 = vpack.c.bf16 %v831, %v831
      %v1381 = vpack.c.bf16 %v1315, %v1315
      %v1382 = vpack.c.bf16 %v1316, %v1316
      %v1383 = vpack.c.bf16 %v1317, %v1317
      %v1384 = vpack.c.bf16 %v832, %v832
      %v1385 = vpack.c.bf16 %v833, %v833
      %v1386 = vpack.c.bf16 %v834, %v834
      %v1387 = vpack.c.bf16 %v1318, %v1318
      %v1388 = vpack.c.bf16 %v1319, %v1319
      %v1389 = vpack.c.bf16 %v1320, %v1320
      %v1390 = vpack.c.bf16 %v835, %v835
      %v1391 = vpack.c.bf16 %v836, %v836
      %v1392 = vpack.c.bf16 %v837, %v837
      %v1393 = vpack.c.bf16 %v1321, %v1321
      %v1394 = vpack.c.bf16 %v1322, %v1322
      %v1395 = vpack.c.bf16 %v1323, %v1323
      %v1396 = vpack.c.bf16 %v838, %v838
      %v1397 = vpack.c.bf16 %v839, %v839
      %v1398 = vpack.c.bf16 %v840, %v840
      %v1399 = vpack.c.bf16 %v1324, %v1324
      %v1400 = vpack.c.bf16 %v1325, %v1325
      %v1401 = vpack.c.bf16 %v1326, %v1326
      %v1402 = vpack.c.bf16 %v841, %v841
      %v1403 = vpack.c.bf16 %v842, %v842
      %v1404 = vpack.c.bf16 %v843, %v843
      %v1405 = vpack.c.bf16 %v1327, %v1327
      %v1406 = vpack.c.bf16 %v1328, %v1328
      %v1407 = vpack.c.bf16 %v1329, %v1329
      %v1408 = vpack.c.bf16 %v844, %v844
      %v1409 = vpack.c.bf16 %v845, %v845
      %v1410 = vpack.c.bf16 %v846, %v846
      %v1411 = vpack.c.bf16 %v1330, %v1330
      %v1412 = vpack.c.bf16 %v1331, %v1331
      %v1413 = vpack.c.bf16 %v1332, %v1332
      %v1414 = vpack.c.bf16 %v847, %v847
      %v1415 = vpack.c.bf16 %v848, %v848
      %v1416 = vpack.c.bf16 %v849, %v849
      %v1417 = vpack.c.bf16 %v1333, %v1333
      %v1418 = vpack.c.bf16 %v1334, %v1334
      %v1419 = vpack.c.bf16 %v1335, %v1335
      %v1420 = vpack.c.bf16 %v850, %v850
      %v1421 = vpack.c.bf16 %v851, %v851
      %v1422 = vpack.c.bf16 %v852, %v852
      %v1423 = vpack.c.bf16 %v1336, %v1336
      %v1424 = vpack.c.bf16 %v1337, %v1337
      %v1425 = vpack.c.bf16 %v1338, %v1338
      %v1426 = vpack.c.bf16 %v853, %v853
      %v1427 = vpack.c.bf16 %v854, %v854
      %v1428 = vpack.c.bf16 %v855, %v855
      %v1429 = vpack.c.bf16 %v1339, %v1339
      %v1430 = vpack.c.bf16 %v1340, %v1340
      %v1431 = vpack.c.bf16 %v1341, %v1341
      %v1432 = vpack.c.bf16 %v856, %v856
      %v1433 = vpack.c.bf16 %v857, %v857
      %v1434 = vpack.c.bf16 %v858, %v858
      %v1435 = vpack.c.bf16 %v1342, %v1342
      %v1436 = vpack.c.bf16 %v1343, %v1343
      %v1437 = vpack.c.bf16 %v1344, %v1344
      %v1438 = vpack.c.bf16 %v859, %v859
      %v1439 = vpack.c.bf16 %v860, %v860
      %v1440 = vpack.c.bf16 %v861, %v861
      %v1441 = vpack.c.bf16 %v1345, %v1345
      %v1442 = vpack.c.bf16 %v1346, %v1346
      %v1443 = vpack.c.bf16 %v1347, %v1347
      %v1444 = vpack.c.bf16 %v862, %v862
      %v1445 = vpack.c.bf16 %v863, %v863
      %v1446 = vpack.c.bf16 %v864, %v864
      %v1447 = vpack.c.bf16 %v1348, %v1348
      %v1448 = vpack.c.bf16 %v1349, %v1349
      %v1449 = vpack.c.bf16 %v1350, %v1350
      %v1450 = vpack.c.bf16 %v865, %v865
      %v1451 = vpack.c.bf16 %v866, %v866
      %v1452 = vpack.c.bf16 %v867, %v867
      %v1453 = vpack.c.bf16 %v1351, %v1351
      %v1454 = vpack.c.bf16 %v1352, %v1352
      %v1455 = vpack.c.bf16 %v1353, %v1353
      %v1456 = vpack.c.bf16 %v868, %v868
      %v1457 = vpack.c.bf16 %v869, %v869
      %v1458 = vpack.c.bf16 %v870, %v870
      %v1459 = vpack.c.bf16 %v1354, %v1354
      %v1460 = vpack.c.bf16 %v1355, %v1355
      %v1461 = vpack.c.bf16 %v1356, %v1356
      %v1462 = vpack.c.bf16 %v871, %v871
      %v1463 = vpack.c.bf16 %v872, %v872
      %v1464 = vpack.c.bf16 %v873, %v873
      %v1465 = vpack.c.bf16 %v1357, %v1357
      %v1466 = vpack.c.bf16 %v1358, %v1358
      %v1467 = vpack.c.bf16 %v1359, %v1359
      %vm1468 = vcmask 60416
      %1469 = vst.msk [vmem:[%s163] sm:$0xf] %vm1468, %v1360
      %1470 = vst.msk [vmem:[%s163 + $0x4] sm:$0xf] %vm1468, %v1361
      %vm1471 = vcmask 57344
      %1472 = vst.msk [vmem:[%s163 + $0x8] sm:$0x1] %vm1471, %v1362
      %1473 = vst.msk [vmem:[%s163 + $0xc] sm:$0xf] %vm1468, %v1363
      %1474 = vst.msk [vmem:[%s163 + $0x10] sm:$0xf] %vm1468, %v1364
      %1475 = vst.msk [vmem:[%s163 + $0x14] sm:$0x1] %vm1471, %v1365
      %1476 = vst.msk [vmem:[%s163 + $0x18] sm:$0xf] %vm1468, %v1366
      %1477 = vst.msk [vmem:[%s163 + $0x1c] sm:$0xf] %vm1468, %v1367
      %1478 = vst.msk [vmem:[%s163 + $0x20] sm:$0x1] %vm1471, %v1368
      %1479 = vst.msk [vmem:[%s163 + $0x24] sm:$0xf] %vm1468, %v1369
      %1480 = vst.msk [vmem:[%s163 + $0x28] sm:$0xf] %vm1468, %v1370
      %1481 = vst.msk [vmem:[%s163 + $0x2c] sm:$0x1] %vm1471, %v1371
      %1482 = vst.msk [vmem:[%s163 + $0x30] sm:$0xf] %vm1468, %v1372
      %1483 = vst.msk [vmem:[%s163 + $0x34] sm:$0xf] %vm1468, %v1373
      %1484 = vst.msk [vmem:[%s163 + $0x38] sm:$0x1] %vm1471, %v1374
      %1485 = vst.msk [vmem:[%s163 + $0x3c] sm:$0xf] %vm1468, %v1375
      %1486 = vst.msk [vmem:[%s163 + $0x40] sm:$0xf] %vm1468, %v1376
      %1487 = vst.msk [vmem:[%s163 + $0x44] sm:$0x1] %vm1471, %v1377
      %1488 = vst.msk [vmem:[%s163 + $0x48] sm:$0xf] %vm1468, %v1378
      %1489 = vst.msk [vmem:[%s163 + $0x4c] sm:$0xf] %vm1468, %v1379
      %1490 = vst.msk [vmem:[%s163 + $0x50] sm:$0x1] %vm1471, %v1380
      %1491 = vst.msk [vmem:[%s163 + $0x54] sm:$0xf] %vm1468, %v1381
      %1492 = vst.msk [vmem:[%s163 + $0x58] sm:$0xf] %vm1468, %v1382
      %1493 = vst.msk [vmem:[%s163 + $0x5c] sm:$0x1] %vm1471, %v1383
      %1494 = vst.msk [vmem:[%s163 + $0x60] sm:$0xf] %vm1468, %v1384
      %1495 = vst.msk [vmem:[%s163 + $0x64] sm:$0xf] %vm1468, %v1385
      %1496 = vst.msk [vmem:[%s163 + $0x68] sm:$0x1] %vm1471, %v1386
      %1497 = vst.msk [vmem:[%s163 + $0x6c] sm:$0xf] %vm1468, %v1387
      %1498 = vst.msk [vmem:[%s163 + $0x70] sm:$0xf] %vm1468, %v1388
      %1499 = vst.msk [vmem:[%s163 + $0x74] sm:$0x1] %vm1471, %v1389
      %1500 = vst.msk [vmem:[%s163 + $0x78] sm:$0xf] %vm1468, %v1390
      %1501 = vst.msk [vmem:[%s163 + $0x7c] sm:$0xf] %vm1468, %v1391
      %1502 = vst.msk [vmem:[%s163 + $0x80] sm:$0x1] %vm1471, %v1392
      %1503 = vst.msk [vmem:[%s163 + $0x84] sm:$0xf] %vm1468, %v1393
      %1504 = vst.msk [vmem:[%s163 + $0x88] sm:$0xf] %vm1468, %v1394
      %1505 = vst.msk [vmem:[%s163 + $0x8c] sm:$0x1] %vm1471, %v1395
      %1506 = vst.msk [vmem:[%s163 + $0x90] sm:$0xf] %vm1468, %v1396
      %1507 = vst.msk [vmem:[%s163 + $0x94] sm:$0xf] %vm1468, %v1397
      %1508 = vst.msk [vmem:[%s163 + $0x98] sm:$0x1] %vm1471, %v1398
      %1509 = vst.msk [vmem:[%s163 + $0x9c] sm:$0xf] %vm1468, %v1399
      %1510 = vst.msk [vmem:[%s163 + $0xa0] sm:$0xf] %vm1468, %v1400
      %1511 = vst.msk [vmem:[%s163 + $0xa4] sm:$0x1] %vm1471, %v1401
      %1512 = vst.msk [vmem:[%s163 + $0xa8] sm:$0xf] %vm1468, %v1402
      %1513 = vst.msk [vmem:[%s163 + $0xac] sm:$0xf] %vm1468, %v1403
      %1514 = vst.msk [vmem:[%s163 + $0xb0] sm:$0x1] %vm1471, %v1404
      %1515 = vst.msk [vmem:[%s163 + $0xb4] sm:$0xf] %vm1468, %v1405
      %1516 = vst.msk [vmem:[%s163 + $0xb8] sm:$0xf] %vm1468, %v1406
      %1517 = vst.msk [vmem:[%s163 + $0xbc] sm:$0x1] %vm1471, %v1407
      %1518 = vst.msk [vmem:[%s163 + $0xc0] sm:$0xf] %vm1468, %v1408
      %1519 = vst.msk [vmem:[%s163 + $0xc4] sm:$0xf] %vm1468, %v1409
      %1520 = vst.msk [vmem:[%s163 + $0xc8] sm:$0x1] %vm1471, %v1410
      %1521 = vst.msk [vmem:[%s163 + $0xcc] sm:$0xf] %vm1468, %v1411
      %1522 = vst.msk [vmem:[%s163 + $0xd0] sm:$0xf] %vm1468, %v1412
      %1523 = vst.msk [vmem:[%s163 + $0xd4] sm:$0x1] %vm1471, %v1413
      %1524 = vst.msk [vmem:[%s163 + $0xd8] sm:$0xf] %vm1468, %v1414
      %1525 = vst.msk [vmem:[%s163 + $0xdc] sm:$0xf] %vm1468, %v1415
      %1526 = vst.msk [vmem:[%s163 + $0xe0] sm:$0x1] %vm1471, %v1416
      %1527 = vst.msk [vmem:[%s163 + $0xe4] sm:$0xf] %vm1468, %v1417
      %1528 = vst.msk [vmem:[%s163 + $0xe8] sm:$0xf] %vm1468, %v1418
      %1529 = vst.msk [vmem:[%s163 + $0xec] sm:$0x1] %vm1471, %v1419
      %1530 = vst.msk [vmem:[%s163 + $0xf0] sm:$0xf] %vm1468, %v1420
      %1531 = vst.msk [vmem:[%s163 + $0xf4] sm:$0xf] %vm1468, %v1421
      %1532 = vst.msk [vmem:[%s163 + $0xf8] sm:$0x1] %vm1471, %v1422
      %1533 = vst.msk [vmem:[%s163 + $0xfc] sm:$0xf] %vm1468, %v1423
      %1534 = vst.msk [vmem:[%s163 + $0x100] sm:$0xf] %vm1468, %v1424
      %1535 = vst.msk [vmem:[%s163 + $0x104] sm:$0x1] %vm1471, %v1425
      %1536 = vst.msk [vmem:[%s163 + $0x108] sm:$0xf] %vm1468, %v1426
      %1537 = vst.msk [vmem:[%s163 + $0x10c] sm:$0xf] %vm1468, %v1427
      %1538 = vst.msk [vmem:[%s163 + $0x110] sm:$0x1] %vm1471, %v1428
      %1539 = vst.msk [vmem:[%s163 + $0x114] sm:$0xf] %vm1468, %v1429
      %1540 = vst.msk [vmem:[%s163 + $0x118] sm:$0xf] %vm1468, %v1430
      %1541 = vst.msk [vmem:[%s163 + $0x11c] sm:$0x1] %vm1471, %v1431
      %1542 = vst.msk [vmem:[%s163 + $0x120] sm:$0xf] %vm1468, %v1432
      %1543 = vst.msk [vmem:[%s163 + $0x124] sm:$0xf] %vm1468, %v1433
      %1544 = vst.msk [vmem:[%s163 + $0x128] sm:$0x1] %vm1471, %v1434
      %1545 = vst.msk [vmem:[%s163 + $0x12c] sm:$0xf] %vm1468, %v1435
      %1546 = vst.msk [vmem:[%s163 + $0x130] sm:$0xf] %vm1468, %v1436
      %1547 = vst.msk [vmem:[%s163 + $0x134] sm:$0x1] %vm1471, %v1437
      %1548 = vst.msk [vmem:[%s163 + $0x138] sm:$0xf] %vm1468, %v1438
      %1549 = vst.msk [vmem:[%s163 + $0x13c] sm:$0xf] %vm1468, %v1439
      %1550 = vst.msk [vmem:[%s163 + $0x140] sm:$0x1] %vm1471, %v1440
      %1551 = vst.msk [vmem:[%s163 + $0x144] sm:$0xf] %vm1468, %v1441
      %1552 = vst.msk [vmem:[%s163 + $0x148] sm:$0xf] %vm1468, %v1442
      %1553 = vst.msk [vmem:[%s163 + $0x14c] sm:$0x1] %vm1471, %v1443
      %1554 = vst.msk [vmem:[%s163 + $0x150] sm:$0xf] %vm1468, %v1444
      %1555 = vst.msk [vmem:[%s163 + $0x154] sm:$0xf] %vm1468, %v1445
      %1556 = vst.msk [vmem:[%s163 + $0x158] sm:$0x1] %vm1471, %v1446
      %1557 = vst.msk [vmem:[%s163 + $0x15c] sm:$0xf] %vm1468, %v1447
      %1558 = vst.msk [vmem:[%s163 + $0x160] sm:$0xf] %vm1468, %v1448
      %1559 = vst.msk [vmem:[%s163 + $0x164] sm:$0x1] %vm1471, %v1449
      %1560 = vst.msk [vmem:[%s163 + $0x168] sm:$0xf] %vm1468, %v1450
      %1561 = vst.msk [vmem:[%s163 + $0x16c] sm:$0xf] %vm1468, %v1451
      %1562 = vst.msk [vmem:[%s163 + $0x170] sm:$0x1] %vm1471, %v1452
      %1563 = vst.msk [vmem:[%s163 + $0x174] sm:$0xf] %vm1468, %v1453
      %1564 = vst.msk [vmem:[%s163 + $0x178] sm:$0xf] %vm1468, %v1454
      %1565 = vst.msk [vmem:[%s163 + $0x17c] sm:$0x1] %vm1471, %v1455
      %1566 = vst.msk [vmem:[%s163 + $0x180] sm:$0xf] %vm1468, %v1456
      %1567 = vst.msk [vmem:[%s163 + $0x184] sm:$0xf] %vm1468, %v1457
      %1568 = vst.msk [vmem:[%s163 + $0x188] sm:$0x1] %vm1471, %v1458
      %1569 = vst.msk [vmem:[%s163 + $0x18c] sm:$0xf] %vm1468, %v1459
      %1570 = vst.msk [vmem:[%s163 + $0x190] sm:$0xf] %vm1468, %v1460
      %1571 = vst.msk [vmem:[%s163 + $0x194] sm:$0x1] %vm1471, %v1461
      %1572 = vst.msk [vmem:[%s163 + $0x198] sm:$0xf] %vm1468, %v1462
      %1573 = vst.msk [vmem:[%s163 + $0x19c] sm:$0xf] %vm1468, %v1463
      %1574 = vst.msk [vmem:[%s163 + $0x1a0] sm:$0x1] %vm1471, %v1464
      %1575 = vst.msk [vmem:[%s163 + $0x1a4] sm:$0xf] %vm1468, %v1465
      %1576 = vst.msk [vmem:[%s163 + $0x1a8] sm:$0xf] %vm1468, %v1466
      %1577 = vst.msk [vmem:[%s163 + $0x1ac] sm:$0x1] %vm1471, %v1467
      %p1578 = scmp.lt.s32.totalorder %s13, 1
      %s1579 = scalar_select %p1578, %s13, 1
      %s1580 = smul.addr %s1579, 108
      %s1581 = smul.addr %s1580, 4
      %s1582 = scalar_lea.vmem %s2, %s1581
      // Predicated region
      $region29: #{tpu_custom_call.1} parent=27 // pred_check
        %p1583 = pneg %p83
      $region30: #{tpu_custom_call.1} parent=27 // pred_check_branch
        %1585 = sbr.rel (%p1583) target = $region32
      $region31: #{tpu_custom_call.1} parent=27 // pred_region
        _
      $region32: #{tpu_custom_call.1} parent=27 // pred_fallthru
        _
    $region28: #{tpu_custom_call.1} parent=5 // pred_fallthru
      _
    %p1586 = scmp.le.s32.totalorder 2, %s8
    // Predicated region
    $region33: #{tpu_custom_call.1} parent=5 // pred_check
      %p1587 = pneg %p1586
    $region34: #{tpu_custom_call.1} parent=5 // pred_check_branch
      %1589 = sbr.rel (%p1587) target = $region36
    $region35: #{tpu_custom_call.1} parent=5 // pred_region
      %s1590 = ssub.s32 %s8, 2
      // Predicated region
      $region37: #{tpu_custom_call.1} parent=35 // pred_check
        %p1591 = pneg %p89
      $region38: #{tpu_custom_call.1} parent=35 // pred_check_branch
        %1593 = sbr.rel (%p1591) target = $region40
      $region39: #{tpu_custom_call.1} parent=35 // pred_region
        %p1594 = scmp.lt.s32.totalorder %s14, 1
        %s1595 = scalar_select %p1594, %s14, 1
        %s1596 = smul.addr %s1595, 108
        %s1597 = smul.addr %s1596, 4
        %s1598 = scalar_lea.vmem %s2, %s1597
      $region40: #{tpu_custom_call.1} parent=35 // pred_fallthru
        _
    $region36: #{tpu_custom_call.1} parent=5 // pred_fallthru
      _
  $region6: #{tpu_custom_call.1} parent=0 // loop_footer
    %s12 = sadd.s32 1, %s8
  $region7: #{tpu_custom_call.1} parent=0 // loop_footer_branch
    %7 = sbr.rel target = $region3
  $region8: #{tpu_custom_call.1} parent=0 // loop_exit
    _

</llo_original>
